<compile_context>
chip_gen: v7x
topology: tpu7x:2x2x1
jax: 0.10.0
libtpu: 0.0.40
codegen_flags: <defaults>
</compile_context>

<pallas_src>
import functools

import jax
import jax.numpy as jnp
from jax.experimental import pallas as pl
from jax.experimental.pallas import tpu as pltpu


def _lstm_kernel(x_ref, w_ih_ref, w_hh_ref, b_ref, w_fc_ref, b_fc_ref,
                 out_ref, xproj_ref, *, batch_pad, seq_len, hidden_pad, input_size):
    Bp, T, Hp, I = batch_pad, seq_len, hidden_pad, input_size
    G = 4 * Hp
    S = 3 * Hp                      # width of the contiguous sigmoid (i, f, o) block

    # ---- Hoisted input projection for ALL time steps (off the recurrence). ----
    # K = I = 2, so compute it with VPU broadcast-multiply-adds rather than an MXU
    # pass, and park the (T*Bp, 4*Hp) result in VMEM scratch so it is not carried
    # live in vregs across the unrolled recurrence.
    x = x_ref[...]                                            # (T*Bp, I)
    w_ih = w_ih_ref[...]                                      # (I, 4*Hp)
    xproj = jnp.broadcast_to(b_ref[...], (T * Bp, G))         # fused b_ih + b_hh
    for i in range(I):
        xproj = xproj + x[:, i:i + 1] * w_ih[i:i + 1, :]
    xproj_ref[...] = xproj

    # ---- Serial recurrence: T fully unrolled steps, (h, c) live in vregs. ----
    h = jnp.zeros((Bp, Hp), jnp.float32)
    c = jnp.zeros((Bp, Hp), jnp.float32)

    for t in range(T):
        # (Bp, 4*Hp) gate pre-activations.  w_hh is read from VMEM inside the step
        # (not hoisted into a 256 KB live value) and the per-step xproj slice is
        # re-loaded from scratch at a sublane-aligned offset (t*Bp, Bp multiple of 8).
        gates = (xproj_ref[t * Bp:(t + 1) * Bp, :]
                 + jnp.dot(h, w_hh_ref[...], preferred_element_type=jnp.float32))
        # Packed gate order (i, f, o, g): 2 activation launches per step (+ tanh(c)).
        # sigmoid(x) == 0.5 * tanh(0.5 * x) + 0.5  (single EUP traversal, exact math).
        sig = 0.5 * jnp.tanh(0.5 * gates[:, :S]) + 0.5
        g_g = jnp.tanh(gates[:, S:])
        i_g = sig[:, 0 * Hp:1 * Hp]
        f_g = sig[:, 1 * Hp:2 * Hp]
        o_g = sig[:, 2 * Hp:3 * Hp]
        c = f_g * c + i_g * g_g
        h = o_g * jnp.tanh(c)

    # ---- Final projection: fc(h_T). Padded h columns are exactly 0 and padded
    # w_fc rows are exactly 0, so the result equals the unpadded math. ----
    out_ref[...] = (jnp.dot(h, w_fc_ref[...], preferred_element_type=jnp.float32)
                    + b_fc_ref[...]).astype(out_ref.dtype)


@jax.jit
def lstm_model_forward(x_btI, kernel_params):
    """x_btI: (B, T, I) float32 (PyTorch batch_first layout).  Returns (B, O)."""
    w_ih_k, w_hh_k, b_k, w_fc_k, b_fc_k = kernel_params
    B, T, I = x_btI.shape
    assert T >= 1, "sequence length must be >= 1"
    Hp = w_hh_k.shape[0]                       # padded hidden size (128)
    O = w_fc_k.shape[1]
    Bp = max(8, ((B + 7) // 8) * 8)            # pad batch to full 8-sublane tiles

    # Padded batch rows are zero-input; they evolve independently through the
    # recurrence (no cross-row mixing) and are sliced off at the end.
    x_pad = jnp.zeros((Bp, T, I), jnp.float32).at[:B].set(x_btI.astype(jnp.float32))
    # time-major, flattened so each step's rows are the contiguous block
    # [t*Bp, (t+1)*Bp) -- a clean (8, .) sublane tile.
    x_2d = jnp.transpose(x_pad, (1, 0, 2)).reshape(T * Bp, I)

    kernel = functools.partial(_lstm_kernel, batch_pad=Bp, seq_len=T,
                               hidden_pad=Hp, input_size=I)

    out = pl.pallas_call(
        kernel,
        out_shape=jax.ShapeDtypeStruct((Bp, O), jnp.float32),
        # no grid: single invocation, everything VMEM-resident (< 0.5 MiB total,
        # fits v5e/v6e 128 MiB and v7x 64 MiB alike).
        in_specs=[pl.BlockSpec(memory_space=pltpu.MemorySpace.VMEM)] * 6,
        out_specs=pl.BlockSpec(memory_space=pltpu.MemorySpace.VMEM),
        scratch_shapes=[pltpu.VMEM((T * Bp, 4 * Hp), jnp.float32)],   # xproj slab
    )(x_2d, w_ih_k, w_hh_k, b_k, w_fc_k, b_fc_k)
    return out[:B]


def init_params(key, input_size=2, hidden_size=64, output_size=2):
    """Deterministic synthetic parameters in raw PyTorch layout."""
    H, I, O = hidden_size, input_size, output_size
    k = 1.0 / jnp.sqrt(H)
    ks = jax.random.split(key, 6)
    w_ih = jax.random.uniform(ks[0], (4 * H, I), jnp.float32, -k, k)
    w_hh = jax.random.uniform(ks[1], (4 * H, H), jnp.float32, -k, k)
    b_ih = jax.random.uniform(ks[2], (4 * H,), jnp.float32, -k, k)
    b_hh = jax.random.uniform(ks[3], (4 * H,), jnp.float32, -k, k)
    w_fc = jax.random.uniform(ks[4], (O, H), jnp.float32, -k, k)
    b_fc = jax.random.uniform(ks[5], (O,), jnp.float32, -k, k)
    return w_ih, w_hh, b_ih, b_hh, w_fc, b_fc


def prepare_kernel_params(raw_params, hidden_pad=128):
    """Pre-transpose, fuse biases, reorder gates to (i, f, o, g) and pad each gate
    block from H to hidden_pad lanes.

    Padded gate columns get zero weights/bias; padded h rows get zero W_hh / W_fc
    rows, so the padded half of the state stays exactly zero through the recurrence
    (sigmoid(0)=0.5 multiplies a zero c; tanh(0)=0).  The invariant is asserted so
    future weight loading cannot silently break it.
    """
    w_ih, w_hh, b_ih, b_hh, w_fc, b_fc = raw_params
    I = w_ih.shape[1]
    H = w_hh.shape[1]
    O = w_fc.shape[0]
    Hp = hidden_pad
    assert Hp >= H

    b_sum = b_ih + b_hh
    # PyTorch stacks gates as (i, f, g, o); repack to (i, f, o, g) so the three
    # sigmoid gates are lane-contiguous.
    torch_gate_for_slot = (0, 1, 3, 2)

    w_ih_k = jnp.zeros((I, 4 * Hp), jnp.float32)
    w_hh_k = jnp.zeros((Hp, 4 * Hp), jnp.float32)
    b_k = jnp.zeros((1, 4 * Hp), jnp.float32)
    for slot, g in enumerate(torch_gate_for_slot):
        w_ih_k = w_ih_k.at[:, slot * Hp:slot * Hp + H].set(w_ih[g * H:(g + 1) * H, :].T)
        w_hh_k = w_hh_k.at[:H, slot * Hp:slot * Hp + H].set(w_hh[g * H:(g + 1) * H, :].T)
        b_k = b_k.at[0, slot * Hp:slot * Hp + H].set(b_sum[g * H:(g + 1) * H])
    w_fc_k = jnp.zeros((Hp, O), jnp.float32).at[:H, :].set(w_fc.T)
    b_fc_k = b_fc[None, :]

    # Zero-padding invariants the kernel relies on.
    assert bool(jnp.all(w_hh_k[H:, :] == 0.0))
    assert bool(jnp.all(w_fc_k[H:, :] == 0.0))
    for slot in range(4):
        assert bool(jnp.all(w_ih_k[:, slot * Hp + H:(slot + 1) * Hp] == 0.0))
        assert bool(jnp.all(w_hh_k[:, slot * Hp + H:(slot + 1) * Hp] == 0.0))
        assert bool(jnp.all(b_k[:, slot * Hp + H:(slot + 1) * Hp] == 0.0))
    return w_ih_k, w_hh_k, b_k, w_fc_k, b_fc_k


def _reference_forward(x_btI, raw_params):
    """Pure-JAX reference matching torch.nn.LSTM(batch_first=True) + Linear."""
    w_ih, w_hh, b_ih, b_hh, w_fc, b_fc = raw_params
    H = w_hh.shape[1]
    B = x_btI.shape[0]
    h = jnp.zeros((B, H), jnp.float32)
    c = jnp.zeros((B, H), jnp.float32)

    def step(carry, x_t):
        h, c = carry
        gates = x_t @ w_ih.T + h @ w_hh.T + b_ih + b_hh
        i = jax.nn.sigmoid(gates[:, 0:H])
        f = jax.nn.sigmoid(gates[:, H:2 * H])
        g = jnp.tanh(gates[:, 2 * H:3 * H])
        o = jax.nn.sigmoid(gates[:, 3 * H:4 * H])
        c = f * c + i * g
        h = o * jnp.tanh(c)
        return (h, c), None

    (h, c), _ = jax.lax.scan(step, (h, c), jnp.transpose(x_btI, (1, 0, 2)))
    return h @ w_fc.T + b_fc


if __name__ == "__main__":
    B, T, I, H, O = 2, 8, 2, 64, 2
    key = jax.random.PRNGKey(0)
    k_x, k_p = jax.random.split(key)
    x = jax.random.normal(k_x, (B, T, I), jnp.float32)     # batch_first like PyTorch
    raw_params = init_params(k_p, input_size=I, hidden_size=H, output_size=O)
    kernel_params = prepare_kernel_params(raw_params, hidden_pad=128)

    out = lstm_model_forward(x, kernel_params)
    out = jax.block_until_ready(out)

    ref = _reference_forward(x, raw_params)
    assert out.shape == (B, O)
    # Tolerance 1e-4: the recurrent dot runs the MXU at default (reduced-mantissa)
    # precision and sigmoid is evaluated via tanh; both are documented deviations
    # from the strict-f32 reference (see review correctness notes).
    assert jnp.allclose(out, ref, atol=1e-4, rtol=1e-4), (out, ref)
    print("KERNEL_OK")
</pallas_src>

<mosaic_0001>
module attributes {stable_mosaic.version = 11 : i64} {
  func.func @_lstm_kernel(%arg0: memref<64x2xf32, #tpu.memory_space<vmem>>, %arg1: memref<2x512xf32, #tpu.memory_space<vmem>>, %arg2: memref<128x512xf32, #tpu.memory_space<vmem>>, %arg3: memref<1x512xf32, #tpu.memory_space<vmem>>, %arg4: memref<128x2xf32, #tpu.memory_space<vmem>>, %arg5: memref<1x2xf32, #tpu.memory_space<vmem>>, %arg6: memref<8x2xf32, #tpu.memory_space<vmem>>, %arg7: memref<64x512xf32, #tpu.memory_space<vmem>>) attributes {dimension_semantics = [], scalar_prefetch = 0 : i64, scratch_operands = 1 : i64, tpu.core_type = #tpu.core_type<tc>} {
    %c0 = arith.constant 0 : index
    %c0_0 = arith.constant 0 : index
    %0 = vector.load %arg0[%c0, %c0_0] : memref<64x2xf32, #tpu.memory_space<vmem>>, vector<64x2xf32>
    %c0_1 = arith.constant 0 : index
    %c0_2 = arith.constant 0 : index
    %1 = vector.load %arg1[%c0_1, %c0_2] : memref<2x512xf32, #tpu.memory_space<vmem>>, vector<2x512xf32>
    %c0_3 = arith.constant 0 : index
    %c0_4 = arith.constant 0 : index
    %2 = vector.load %arg3[%c0_3, %c0_4] : memref<1x512xf32, #tpu.memory_space<vmem>>, vector<1x512xf32>
    %3 = vector.shape_cast %2 : vector<1x512xf32> to vector<1x512xf32>
    %4 = vector.broadcast %3 : vector<1x512xf32> to vector<64x512xf32>
    %5 = vector.extract_strided_slice %0 {offsets = [0, 0], sizes = [64, 1], strides = [1, 1]} : vector<64x2xf32> to vector<64x1xf32>
    %6 = vector.extract_strided_slice %1 {offsets = [0, 0], sizes = [1, 512], strides = [1, 1]} : vector<2x512xf32> to vector<1x512xf32>
    %7 = vector.broadcast %5 : vector<64x1xf32> to vector<64x512xf32>
    %8 = vector.broadcast %6 : vector<1x512xf32> to vector<64x512xf32>
    %9 = arith.mulf %7, %8 : vector<64x512xf32>
    %10 = arith.addf %4, %9 : vector<64x512xf32>
    %11 = vector.extract_strided_slice %0 {offsets = [0, 1], sizes = [64, 1], strides = [1, 1]} : vector<64x2xf32> to vector<64x1xf32>
    %12 = vector.extract_strided_slice %1 {offsets = [1, 0], sizes = [1, 512], strides = [1, 1]} : vector<2x512xf32> to vector<1x512xf32>
    %13 = vector.broadcast %11 : vector<64x1xf32> to vector<64x512xf32>
    %14 = vector.broadcast %12 : vector<1x512xf32> to vector<64x512xf32>
    %15 = arith.mulf %13, %14 : vector<64x512xf32>
    %16 = arith.addf %10, %15 : vector<64x512xf32>
    %c0_5 = arith.constant 0 : index
    %c0_6 = arith.constant 0 : index
    %17 = vector.load %arg7[%c0_5, %c0_6] : memref<64x512xf32, #tpu.memory_space<vmem>>, vector<64x512xf32>
    tpu.vector_store %arg7[%c0_5, %c0_6], %16 {strides = array<i32>} : memref<64x512xf32, #tpu.memory_space<vmem>>, vector<64x512xf32>,
    %cst = arith.constant 0.000000e+00 : f32
    %18 = vector.broadcast %cst : f32 to vector<8x128xf32>
    %cst_7 = arith.constant 0.000000e+00 : f32
    %19 = vector.broadcast %cst_7 : f32 to vector<8x128xf32>
    %c0_8 = arith.constant 0 : index
    %c0_9 = arith.constant 0 : index
    %20 = vector.load %arg7[%c0_8, %c0_9] : memref<64x512xf32, #tpu.memory_space<vmem>>, vector<8x512xf32>
    %c0_10 = arith.constant 0 : index
    %c0_11 = arith.constant 0 : index
    %21 = vector.load %arg2[%c0_10, %c0_11] : memref<128x512xf32, #tpu.memory_space<vmem>>, vector<128x512xf32>
    %cst_12 = arith.constant dense<0.000000e+00> : vector<8x512xf32>
    %22 = tpu.matmul %18, %21, %cst_12 {dimension_numbers = #tpu.dot_dimension_numbers<[1], [0], [0], [1], [0, 0, 1, 1], [], []>} : vector<8x128xf32>, vector<128x512xf32>, vector<8x512xf32> -> vector<8x512xf32>
    %23 = arith.addf %20, %22 : vector<8x512xf32>
    %24 = vector.extract_strided_slice %23 {offsets = [0, 0], sizes = [8, 384], strides = [1, 1]} : vector<8x512xf32> to vector<8x384xf32>
    %cst_13 = arith.constant 5.000000e-01 : f32
    %25 = vector.broadcast %cst_13 : f32 to vector<8x384xf32>
    %26 = arith.mulf %25, %24 : vector<8x384xf32>
    %27 = math.tanh %26 : vector<8x384xf32>
    %cst_14 = arith.constant 5.000000e-01 : f32
    %28 = vector.broadcast %cst_14 : f32 to vector<8x384xf32>
    %29 = arith.mulf %28, %27 : vector<8x384xf32>
    %cst_15 = arith.constant 5.000000e-01 : f32
    %30 = vector.broadcast %cst_15 : f32 to vector<8x384xf32>
    %31 = arith.addf %29, %30 : vector<8x384xf32>
    %32 = vector.extract_strided_slice %23 {offsets = [0, 384], sizes = [8, 128], strides = [1, 1]} : vector<8x512xf32> to vector<8x128xf32>
    %33 = math.tanh %32 : vector<8x128xf32>
    %34 = vector.extract_strided_slice %31 {offsets = [0, 0], sizes = [8, 128], strides = [1, 1]} : vector<8x384xf32> to vector<8x128xf32>
    %35 = vector.extract_strided_slice %31 {offsets = [0, 128], sizes = [8, 128], strides = [1, 1]} : vector<8x384xf32> to vector<8x128xf32>
    %36 = vector.extract_strided_slice %31 {offsets = [0, 256], sizes = [8, 128], strides = [1, 1]} : vector<8x384xf32> to vector<8x128xf32>
    %37 = arith.mulf %35, %19 : vector<8x128xf32>
    %38 = arith.mulf %34, %33 : vector<8x128xf32>
    %39 = arith.addf %37, %38 : vector<8x128xf32>
    %40 = math.tanh %39 : vector<8x128xf32>
    %41 = arith.mulf %36, %40 : vector<8x128xf32>
    %c8 = arith.constant 8 : index
    %c0_16 = arith.constant 0 : index
    %42 = vector.load %arg7[%c8, %c0_16] : memref<64x512xf32, #tpu.memory_space<vmem>>, vector<8x512xf32>
    %c0_17 = arith.constant 0 : index
    %c0_18 = arith.constant 0 : index
    %43 = vector.load %arg2[%c0_17, %c0_18] : memref<128x512xf32, #tpu.memory_space<vmem>>, vector<128x512xf32>
    %cst_19 = arith.constant dense<0.000000e+00> : vector<8x512xf32>
    %44 = tpu.matmul %41, %43, %cst_19 {dimension_numbers = #tpu.dot_dimension_numbers<[1], [0], [0], [1], [0, 0, 1, 1], [], []>} : vector<8x128xf32>, vector<128x512xf32>, vector<8x512xf32> -> vector<8x512xf32>
    %45 = arith.addf %42, %44 : vector<8x512xf32>
    %46 = vector.extract_strided_slice %45 {offsets = [0, 0], sizes = [8, 384], strides = [1, 1]} : vector<8x512xf32> to vector<8x384xf32>
    %cst_20 = arith.constant 5.000000e-01 : f32
    %47 = vector.broadcast %cst_20 : f32 to vector<8x384xf32>
    %48 = arith.mulf %47, %46 : vector<8x384xf32>
    %49 = math.tanh %48 : vector<8x384xf32>
    %cst_21 = arith.constant 5.000000e-01 : f32
    %50 = vector.broadcast %cst_21 : f32 to vector<8x384xf32>
    %51 = arith.mulf %50, %49 : vector<8x384xf32>
    %cst_22 = arith.constant 5.000000e-01 : f32
    %52 = vector.broadcast %cst_22 : f32 to vector<8x384xf32>
    %53 = arith.addf %51, %52 : vector<8x384xf32>
    %54 = vector.extract_strided_slice %45 {offsets = [0, 384], sizes = [8, 128], strides = [1, 1]} : vector<8x512xf32> to vector<8x128xf32>
    %55 = math.tanh %54 : vector<8x128xf32>
    %56 = vector.extract_strided_slice %53 {offsets = [0, 0], sizes = [8, 128], strides = [1, 1]} : vector<8x384xf32> to vector<8x128xf32>
    %57 = vector.extract_strided_slice %53 {offsets = [0, 128], sizes = [8, 128], strides = [1, 1]} : vector<8x384xf32> to vector<8x128xf32>
    %58 = vector.extract_strided_slice %53 {offsets = [0, 256], sizes = [8, 128], strides = [1, 1]} : vector<8x384xf32> to vector<8x128xf32>
    %59 = arith.mulf %57, %39 : vector<8x128xf32>
    %60 = arith.mulf %56, %55 : vector<8x128xf32>
    %61 = arith.addf %59, %60 : vector<8x128xf32>
    %62 = math.tanh %61 : vector<8x128xf32>
    %63 = arith.mulf %58, %62 : vector<8x128xf32>
    %c16 = arith.constant 16 : index
    %c0_23 = arith.constant 0 : index
    %64 = vector.load %arg7[%c16, %c0_23] : memref<64x512xf32, #tpu.memory_space<vmem>>, vector<8x512xf32>
    %c0_24 = arith.constant 0 : index
    %c0_25 = arith.constant 0 : index
    %65 = vector.load %arg2[%c0_24, %c0_25] : memref<128x512xf32, #tpu.memory_space<vmem>>, vector<128x512xf32>
    %cst_26 = arith.constant dense<0.000000e+00> : vector<8x512xf32>
    %66 = tpu.matmul %63, %65, %cst_26 {dimension_numbers = #tpu.dot_dimension_numbers<[1], [0], [0], [1], [0, 0, 1, 1], [], []>} : vector<8x128xf32>, vector<128x512xf32>, vector<8x512xf32> -> vector<8x512xf32>
    %67 = arith.addf %64, %66 : vector<8x512xf32>
    %68 = vector.extract_strided_slice %67 {offsets = [0, 0], sizes = [8, 384], strides = [1, 1]} : vector<8x512xf32> to vector<8x384xf32>
    %cst_27 = arith.constant 5.000000e-01 : f32
    %69 = vector.broadcast %cst_27 : f32 to vector<8x384xf32>
    %70 = arith.mulf %69, %68 : vector<8x384xf32>
    %71 = math.tanh %70 : vector<8x384xf32>
    %cst_28 = arith.constant 5.000000e-01 : f32
    %72 = vector.broadcast %cst_28 : f32 to vector<8x384xf32>
    %73 = arith.mulf %72, %71 : vector<8x384xf32>
    %cst_29 = arith.constant 5.000000e-01 : f32
    %74 = vector.broadcast %cst_29 : f32 to vector<8x384xf32>
    %75 = arith.addf %73, %74 : vector<8x384xf32>
    %76 = vector.extract_strided_slice %67 {offsets = [0, 384], sizes = [8, 128], strides = [1, 1]} : vector<8x512xf32> to vector<8x128xf32>
    %77 = math.tanh %76 : vector<8x128xf32>
    %78 = vector.extract_strided_slice %75 {offsets = [0, 0], sizes = [8, 128], strides = [1, 1]} : vector<8x384xf32> to vector<8x128xf32>
    %79 = vector.extract_strided_slice %75 {offsets = [0, 128], sizes = [8, 128], strides = [1, 1]} : vector<8x384xf32> to vector<8x128xf32>
    %80 = vector.extract_strided_slice %75 {offsets = [0, 256], sizes = [8, 128], strides = [1, 1]} : vector<8x384xf32> to vector<8x128xf32>
    %81 = arith.mulf %79, %61 : vector<8x128xf32>
    %82 = arith.mulf %78, %77 : vector<8x128xf32>
    %83 = arith.addf %81, %82 : vector<8x128xf32>
    %84 = math.tanh %83 : vector<8x128xf32>
    %85 = arith.mulf %80, %84 : vector<8x128xf32>
    %c24 = arith.constant 24 : index
    %c0_30 = arith.constant 0 : index
    %86 = vector.load %arg7[%c24, %c0_30] : memref<64x512xf32, #tpu.memory_space<vmem>>, vector<8x512xf32>
    %c0_31 = arith.constant 0 : index
    %c0_32 = arith.constant 0 : index
    %87 = vector.load %arg2[%c0_31, %c0_32] : memref<128x512xf32, #tpu.memory_space<vmem>>, vector<128x512xf32>
    %cst_33 = arith.constant dense<0.000000e+00> : vector<8x512xf32>
    %88 = tpu.matmul %85, %87, %cst_33 {dimension_numbers = #tpu.dot_dimension_numbers<[1], [0], [0], [1], [0, 0, 1, 1], [], []>} : vector<8x128xf32>, vector<128x512xf32>, vector<8x512xf32> -> vector<8x512xf32>
    %89 = arith.addf %86, %88 : vector<8x512xf32>
    %90 = vector.extract_strided_slice %89 {offsets = [0, 0], sizes = [8, 384], strides = [1, 1]} : vector<8x512xf32> to vector<8x384xf32>
    %cst_34 = arith.constant 5.000000e-01 : f32
    %91 = vector.broadcast %cst_34 : f32 to vector<8x384xf32>
    %92 = arith.mulf %91, %90 : vector<8x384xf32>
    %93 = math.tanh %92 : vector<8x384xf32>
    %cst_35 = arith.constant 5.000000e-01 : f32
    %94 = vector.broadcast %cst_35 : f32 to vector<8x384xf32>
    %95 = arith.mulf %94, %93 : vector<8x384xf32>
    %cst_36 = arith.constant 5.000000e-01 : f32
    %96 = vector.broadcast %cst_36 : f32 to vector<8x384xf32>
    %97 = arith.addf %95, %96 : vector<8x384xf32>
    %98 = vector.extract_strided_slice %89 {offsets = [0, 384], sizes = [8, 128], strides = [1, 1]} : vector<8x512xf32> to vector<8x128xf32>
    %99 = math.tanh %98 : vector<8x128xf32>
    %100 = vector.extract_strided_slice %97 {offsets = [0, 0], sizes = [8, 128], strides = [1, 1]} : vector<8x384xf32> to vector<8x128xf32>
    %101 = vector.extract_strided_slice %97 {offsets = [0, 128], sizes = [8, 128], strides = [1, 1]} : vector<8x384xf32> to vector<8x128xf32>
    %102 = vector.extract_strided_slice %97 {offsets = [0, 256], sizes = [8, 128], strides = [1, 1]} : vector<8x384xf32> to vector<8x128xf32>
    %103 = arith.mulf %101, %83 : vector<8x128xf32>
    %104 = arith.mulf %100, %99 : vector<8x128xf32>
    %105 = arith.addf %103, %104 : vector<8x128xf32>
    %106 = math.tanh %105 : vector<8x128xf32>
    %107 = arith.mulf %102, %106 : vector<8x128xf32>
    %c32 = arith.constant 32 : index
    %c0_37 = arith.constant 0 : index
    %108 = vector.load %arg7[%c32, %c0_37] : memref<64x512xf32, #tpu.memory_space<vmem>>, vector<8x512xf32>
    %c0_38 = arith.constant 0 : index
    %c0_39 = arith.constant 0 : index
    %109 = vector.load %arg2[%c0_38, %c0_39] : memref<128x512xf32, #tpu.memory_space<vmem>>, vector<128x512xf32>
    %cst_40 = arith.constant dense<0.000000e+00> : vector<8x512xf32>
    %110 = tpu.matmul %107, %109, %cst_40 {dimension_numbers = #tpu.dot_dimension_numbers<[1], [0], [0], [1], [0, 0, 1, 1], [], []>} : vector<8x128xf32>, vector<128x512xf32>, vector<8x512xf32> -> vector<8x512xf32>
    %111 = arith.addf %108, %110 : vector<8x512xf32>
    %112 = vector.extract_strided_slice %111 {offsets = [0, 0], sizes = [8, 384], strides = [1, 1]} : vector<8x512xf32> to vector<8x384xf32>
    %cst_41 = arith.constant 5.000000e-01 : f32
    %113 = vector.broadcast %cst_41 : f32 to vector<8x384xf32>
    %114 = arith.mulf %113, %112 : vector<8x384xf32>
    %115 = math.tanh %114 : vector<8x384xf32>
    %cst_42 = arith.constant 5.000000e-01 : f32
    %116 = vector.broadcast %cst_42 : f32 to vector<8x384xf32>
    %117 = arith.mulf %116, %115 : vector<8x384xf32>
    %cst_43 = arith.constant 5.000000e-01 : f32
    %118 = vector.broadcast %cst_43 : f32 to vector<8x384xf32>
    %119 = arith.addf %117, %118 : vector<8x384xf32>
    %120 = vector.extract_strided_slice %111 {offsets = [0, 384], sizes = [8, 128], strides = [1, 1]} : vector<8x512xf32> to vector<8x128xf32>
    %121 = math.tanh %120 : vector<8x128xf32>
    %122 = vector.extract_strided_slice %119 {offsets = [0, 0], sizes = [8, 128], strides = [1, 1]} : vector<8x384xf32> to vector<8x128xf32>
    %123 = vector.extract_strided_slice %119 {offsets = [0, 128], sizes = [8, 128], strides = [1, 1]} : vector<8x384xf32> to vector<8x128xf32>
    %124 = vector.extract_strided_slice %119 {offsets = [0, 256], sizes = [8, 128], strides = [1, 1]} : vector<8x384xf32> to vector<8x128xf32>
    %125 = arith.mulf %123, %105 : vector<8x128xf32>
    %126 = arith.mulf %122, %121 : vector<8x128xf32>
    %127 = arith.addf %125, %126 : vector<8x128xf32>
    %128 = math.tanh %127 : vector<8x128xf32>
    %129 = arith.mulf %124, %128 : vector<8x128xf32>
    %c40 = arith.constant 40 : index
    %c0_44 = arith.constant 0 : index
    %130 = vector.load %arg7[%c40, %c0_44] : memref<64x512xf32, #tpu.memory_space<vmem>>, vector<8x512xf32>
    %c0_45 = arith.constant 0 : index
    %c0_46 = arith.constant 0 : index
    %131 = vector.load %arg2[%c0_45, %c0_46] : memref<128x512xf32, #tpu.memory_space<vmem>>, vector<128x512xf32>
    %cst_47 = arith.constant dense<0.000000e+00> : vector<8x512xf32>
    %132 = tpu.matmul %129, %131, %cst_47 {dimension_numbers = #tpu.dot_dimension_numbers<[1], [0], [0], [1], [0, 0, 1, 1], [], []>} : vector<8x128xf32>, vector<128x512xf32>, vector<8x512xf32> -> vector<8x512xf32>
    %133 = arith.addf %130, %132 : vector<8x512xf32>
    %134 = vector.extract_strided_slice %133 {offsets = [0, 0], sizes = [8, 384], strides = [1, 1]} : vector<8x512xf32> to vector<8x384xf32>
    %cst_48 = arith.constant 5.000000e-01 : f32
    %135 = vector.broadcast %cst_48 : f32 to vector<8x384xf32>
    %136 = arith.mulf %135, %134 : vector<8x384xf32>
    %137 = math.tanh %136 : vector<8x384xf32>
    %cst_49 = arith.constant 5.000000e-01 : f32
    %138 = vector.broadcast %cst_49 : f32 to vector<8x384xf32>
    %139 = arith.mulf %138, %137 : vector<8x384xf32>
    %cst_50 = arith.constant 5.000000e-01 : f32
    %140 = vector.broadcast %cst_50 : f32 to vector<8x384xf32>
    %141 = arith.addf %139, %140 : vector<8x384xf32>
    %142 = vector.extract_strided_slice %133 {offsets = [0, 384], sizes = [8, 128], strides = [1, 1]} : vector<8x512xf32> to vector<8x128xf32>
    %143 = math.tanh %142 : vector<8x128xf32>
    %144 = vector.extract_strided_slice %141 {offsets = [0, 0], sizes = [8, 128], strides = [1, 1]} : vector<8x384xf32> to vector<8x128xf32>
    %145 = vector.extract_strided_slice %141 {offsets = [0, 128], sizes = [8, 128], strides = [1, 1]} : vector<8x384xf32> to vector<8x128xf32>
    %146 = vector.extract_strided_slice %141 {offsets = [0, 256], sizes = [8, 128], strides = [1, 1]} : vector<8x384xf32> to vector<8x128xf32>
    %147 = arith.mulf %145, %127 : vector<8x128xf32>
    %148 = arith.mulf %144, %143 : vector<8x128xf32>
    %149 = arith.addf %147, %148 : vector<8x128xf32>
    %150 = math.tanh %149 : vector<8x128xf32>
    %151 = arith.mulf %146, %150 : vector<8x128xf32>
    %c48 = arith.constant 48 : index
    %c0_51 = arith.constant 0 : index
    %152 = vector.load %arg7[%c48, %c0_51] : memref<64x512xf32, #tpu.memory_space<vmem>>, vector<8x512xf32>
    %c0_52 = arith.constant 0 : index
    %c0_53 = arith.constant 0 : index
    %153 = vector.load %arg2[%c0_52, %c0_53] : memref<128x512xf32, #tpu.memory_space<vmem>>, vector<128x512xf32>
    %cst_54 = arith.constant dense<0.000000e+00> : vector<8x512xf32>
    %154 = tpu.matmul %151, %153, %cst_54 {dimension_numbers = #tpu.dot_dimension_numbers<[1], [0], [0], [1], [0, 0, 1, 1], [], []>} : vector<8x128xf32>, vector<128x512xf32>, vector<8x512xf32> -> vector<8x512xf32>
    %155 = arith.addf %152, %154 : vector<8x512xf32>
    %156 = vector.extract_strided_slice %155 {offsets = [0, 0], sizes = [8, 384], strides = [1, 1]} : vector<8x512xf32> to vector<8x384xf32>
    %cst_55 = arith.constant 5.000000e-01 : f32
    %157 = vector.broadcast %cst_55 : f32 to vector<8x384xf32>
    %158 = arith.mulf %157, %156 : vector<8x384xf32>
    %159 = math.tanh %158 : vector<8x384xf32>
    %cst_56 = arith.constant 5.000000e-01 : f32
    %160 = vector.broadcast %cst_56 : f32 to vector<8x384xf32>
    %161 = arith.mulf %160, %159 : vector<8x384xf32>
    %cst_57 = arith.constant 5.000000e-01 : f32
    %162 = vector.broadcast %cst_57 : f32 to vector<8x384xf32>
    %163 = arith.addf %161, %162 : vector<8x384xf32>
    %164 = vector.extract_strided_slice %155 {offsets = [0, 384], sizes = [8, 128], strides = [1, 1]} : vector<8x512xf32> to vector<8x128xf32>
    %165 = math.tanh %164 : vector<8x128xf32>
    %166 = vector.extract_strided_slice %163 {offsets = [0, 0], sizes = [8, 128], strides = [1, 1]} : vector<8x384xf32> to vector<8x128xf32>
    %167 = vector.extract_strided_slice %163 {offsets = [0, 128], sizes = [8, 128], strides = [1, 1]} : vector<8x384xf32> to vector<8x128xf32>
    %168 = vector.extract_strided_slice %163 {offsets = [0, 256], sizes = [8, 128], strides = [1, 1]} : vector<8x384xf32> to vector<8x128xf32>
    %169 = arith.mulf %167, %149 : vector<8x128xf32>
    %170 = arith.mulf %166, %165 : vector<8x128xf32>
    %171 = arith.addf %169, %170 : vector<8x128xf32>
    %172 = math.tanh %171 : vector<8x128xf32>
    %173 = arith.mulf %168, %172 : vector<8x128xf32>
    %c56 = arith.constant 56 : index
    %c0_58 = arith.constant 0 : index
    %174 = vector.load %arg7[%c56, %c0_58] : memref<64x512xf32, #tpu.memory_space<vmem>>, vector<8x512xf32>
    %c0_59 = arith.constant 0 : index
    %c0_60 = arith.constant 0 : index
    %175 = vector.load %arg2[%c0_59, %c0_60] : memref<128x512xf32, #tpu.memory_space<vmem>>, vector<128x512xf32>
    %cst_61 = arith.constant dense<0.000000e+00> : vector<8x512xf32>
    %176 = tpu.matmul %173, %175, %cst_61 {dimension_numbers = #tpu.dot_dimension_numbers<[1], [0], [0], [1], [0, 0, 1, 1], [], []>} : vector<8x128xf32>, vector<128x512xf32>, vector<8x512xf32> -> vector<8x512xf32>
    %177 = arith.addf %174, %176 : vector<8x512xf32>
    %178 = vector.extract_strided_slice %177 {offsets = [0, 0], sizes = [8, 384], strides = [1, 1]} : vector<8x512xf32> to vector<8x384xf32>
    %cst_62 = arith.constant 5.000000e-01 : f32
    %179 = vector.broadcast %cst_62 : f32 to vector<8x384xf32>
    %180 = arith.mulf %179, %178 : vector<8x384xf32>
    %181 = math.tanh %180 : vector<8x384xf32>
    %cst_63 = arith.constant 5.000000e-01 : f32
    %182 = vector.broadcast %cst_63 : f32 to vector<8x384xf32>
    %183 = arith.mulf %182, %181 : vector<8x384xf32>
    %cst_64 = arith.constant 5.000000e-01 : f32
    %184 = vector.broadcast %cst_64 : f32 to vector<8x384xf32>
    %185 = arith.addf %183, %184 : vector<8x384xf32>
    %186 = vector.extract_strided_slice %177 {offsets = [0, 384], sizes = [8, 128], strides = [1, 1]} : vector<8x512xf32> to vector<8x128xf32>
    %187 = math.tanh %186 : vector<8x128xf32>
    %188 = vector.extract_strided_slice %185 {offsets = [0, 0], sizes = [8, 128], strides = [1, 1]} : vector<8x384xf32> to vector<8x128xf32>
    %189 = vector.extract_strided_slice %185 {offsets = [0, 128], sizes = [8, 128], strides = [1, 1]} : vector<8x384xf32> to vector<8x128xf32>
    %190 = vector.extract_strided_slice %185 {offsets = [0, 256], sizes = [8, 128], strides = [1, 1]} : vector<8x384xf32> to vector<8x128xf32>
    %191 = arith.mulf %189, %171 : vector<8x128xf32>
    %192 = arith.mulf %188, %187 : vector<8x128xf32>
    %193 = arith.addf %191, %192 : vector<8x128xf32>
    %194 = math.tanh %193 : vector<8x128xf32>
    %195 = arith.mulf %190, %194 : vector<8x128xf32>
    %c0_65 = arith.constant 0 : index
    %c0_66 = arith.constant 0 : index
    %196 = vector.load %arg4[%c0_65, %c0_66] : memref<128x2xf32, #tpu.memory_space<vmem>>, vector<128x2xf32>
    %cst_67 = arith.constant dense<0.000000e+00> : vector<8x2xf32>
    %197 = tpu.matmul %195, %196, %cst_67 {dimension_numbers = #tpu.dot_dimension_numbers<[1], [0], [0], [1], [0, 0, 1, 1], [], []>} : vector<8x128xf32>, vector<128x2xf32>, vector<8x2xf32> -> vector<8x2xf32>
    %c0_68 = arith.constant 0 : index
    %c0_69 = arith.constant 0 : index
    %198 = vector.load %arg5[%c0_68, %c0_69] : memref<1x2xf32, #tpu.memory_space<vmem>>, vector<1x2xf32>
    %199 = vector.broadcast %198 : vector<1x2xf32> to vector<8x2xf32>
    %200 = arith.addf %197, %199 : vector<8x2xf32>
    %c0_70 = arith.constant 0 : index
    %c0_71 = arith.constant 0 : index
    %201 = vector.load %arg6[%c0_70, %c0_71] : memref<8x2xf32, #tpu.memory_space<vmem>>, vector<8x2xf32>
    tpu.vector_store %arg6[%c0_70, %c0_71], %200 {strides = array<i32>} : memref<8x2xf32, #tpu.memory_space<vmem>>, vector<8x2xf32>,
    return
  }
}

</mosaic_0001>

<llo_original>
// kernel: lstm_model_forward.1
$region0: #{lstm_model_forward.1}
  #allocation0 [shape = 'u32[]', space=smem, size = 0x4, offset = 0x4, fixed_abs, tag = 'smem constant byte address 0x4 - core index']
  #allocation1 [shape = 'u32[144,128]{1,0:T(1,128)}', space=vmem, size = 0x12000, scoped, tag = 'internal scratch']
  #allocation2 [shape = 'f32[64,512]{1,0:T(8,128)}', space=vmem, size = 0x20000, scoped, tag = 'scratch operand']
  %s0 = inlined_call_operand.vmem [shape: f32[64,2], index: 0, kind: input, shape index: {}]
  %s1 = inlined_call_operand.vmem [shape: f32[2,512], index: 1, kind: input, shape index: {}]
  %s2 = inlined_call_operand.hbm [shape: f32[128,512], index: 2, kind: input, shape index: {}]
  %s3 = inlined_call_operand.vmem [shape: f32[1,512], index: 3, kind: input, shape index: {}]
  %s4 = inlined_call_operand.vmem [shape: f32[128,2], index: 4, kind: input, shape index: {}]
  %s5 = inlined_call_operand.vmem [shape: f32[1,2], index: 5, kind: input, shape index: {}]
  %s6 = inlined_call_operand.vmem [shape: f32[8,2], index: 6, kind: output, shape index: {}]
  %s7 = sld [smem:[#allocation0]]
  $region38: #{lstm_model_forward.1} parent=0
    _
  %s9 = ssub.s32 1, %s7
  %s10 = scalar_select 0, %s9, %s7
  $region1: #{lstm_model_forward.1} parent=0
    #allocation3 [shape = 'u8[262144]{0}', space=vmem, size = 0x40000, scoped, tag = 'input window, operand 2, single buffered']
    #allocation4 [shape = 's32[1]{0}', space=sflag, size = 0x4, scoped, tag = 'scoped memory for lstm_model_forward.1']
    %11 = vsyncpa [#allocation4], 0
    // Predicated region
    $region2: #{lstm_model_forward.1} parent=1 // pred_check
      _
    $region3: #{lstm_model_forward.1} parent=1 // pred_check_branch
      %13 = sbr.rel (0) target = $region5
    $region4: #{lstm_model_forward.1} parent=1 // pred_region
      _
    $region5: #{lstm_model_forward.1} parent=1 // pred_fallthru
      _
    // Predicated region
    $region6: #{lstm_model_forward.1} parent=1 // pred_check
      _
    $region7: #{lstm_model_forward.1} parent=1 // pred_check_branch
      %15 = sbr.rel (0) target = $region9
    $region8: #{lstm_model_forward.1} parent=1 // pred_region
      _
    $region9: #{lstm_model_forward.1} parent=1 // pred_fallthru
      _
    // Predicated region
    $region10: #{lstm_model_forward.1} parent=1 // pred_check
      _
    $region11: #{lstm_model_forward.1} parent=1 // pred_check_branch
      %17 = sbr.rel (0) target = $region13
    $region12: #{lstm_model_forward.1} parent=1 // pred_region
      %s19 = ssub.s32 8192, 8192
      %20 = vsyncadd [#allocation4], %s19
      %s21 = sshll.u32 [#allocation3], 4
      %s22 = int_to_ptr.vmem [resolvable:$true] %s21
      %27 = dma.hbm_to_vmem [thread:$0]  %s2, 8192, %s22, [#allocation4], 512, 512, 32
    $region13: #{lstm_model_forward.1} parent=1 // pred_fallthru
      _
    // Predicated region
    $region14: #{lstm_model_forward.1} parent=1 // pred_check
      _
    $region15: #{lstm_model_forward.1} parent=1 // pred_check_branch
      %29 = sbr.rel (0) target = $region17
    $region16: #{lstm_model_forward.1} parent=1 // pred_region
      _
    $region17: #{lstm_model_forward.1} parent=1 // pred_fallthru
      _
    // Predicated region
    $region18: #{lstm_model_forward.1} parent=1 // pred_check
      _
    $region19: #{lstm_model_forward.1} parent=1 // pred_check_branch
      %31 = sbr.rel (0) target = $region21
    $region20: #{lstm_model_forward.1} parent=1 // pred_region
      _
    $region21: #{lstm_model_forward.1} parent=1 // pred_fallthru
      _
    // Predicated region
    $region22: #{lstm_model_forward.1} parent=1 // pred_check
      _
    $region23: #{lstm_model_forward.1} parent=1 // pred_check_branch
      %33 = sbr.rel (0) target = $region25
    $region24: #{lstm_model_forward.1} parent=1 // pred_region
      _
    $region25: #{lstm_model_forward.1} parent=1 // pred_fallthru
      _
    // Predicated region
    $region26: #{lstm_model_forward.1} parent=1 // pred_check
      _
    $region27: #{lstm_model_forward.1} parent=1 // pred_check_branch
      %35 = sbr.rel (0) target = $region29
    $region28: #{lstm_model_forward.1} parent=1 // pred_region
      %36 = dma.done [#allocation4], 8192
    $region29: #{lstm_model_forward.1} parent=1 // pred_fallthru
      _
    %v37 = vld [vmem:[%s0] sm:$0xff]
    %v38 = vld [vmem:[%s0 + $0x8] sm:$0xff]
    %v39 = vld [vmem:[%s0 + $0x10] sm:$0xff]
    %v40 = vld [vmem:[%s0 + $0x18] sm:$0xff]
    %v41 = vld [vmem:[%s0 + $0x20] sm:$0xff]
    %v42 = vld [vmem:[%s0 + $0x28] sm:$0xff]
    %v43 = vld [vmem:[%s0 + $0x30] sm:$0xff]
    %v44 = vld [vmem:[%s0 + $0x38] sm:$0xff]
    %v45 = vld [vmem:[%s1] sm:$0xff]
    %v46 = vld [vmem:[%s3] sm:$0xf]
    %v48 = vlaneseq
    %v49 = vshrl.u32 %v48, 7
    %v50 = vsub.s32 0, %v49
    %v51 = vrot.slane %v46, %v50
    %v52 = vlaneseq
    %v53 = vshrl.u32 %v52, 7
    %v54 = vsub.s32 1, %v53
    %v55 = vrot.slane %v46, %v54
    %v56 = vlaneseq
    %v57 = vshrl.u32 %v56, 7
    %v58 = vsub.s32 2, %v57
    %v59 = vrot.slane %v46, %v58
    %v60 = vlaneseq
    %v61 = vshrl.u32 %v60, 7
    %v62 = vsub.s32 3, %v61
    %v63 = vrot.slane %v46, %v62
    %69 = vset.pattern.permute.xlu0 0
    %70 = vperm.xlu0 %69, %v37
    %v71 = vpop.permute.xlu0 %70
    %74 = vset.pattern.permute.xlu0 0
    %75 = vperm.xlu0 %74, %v38
    %v76 = vpop.permute.xlu0 %75
    %79 = vset.pattern.permute.xlu0 0
    %80 = vperm.xlu0 %79, %v39
    %v81 = vpop.permute.xlu0 %80
    %84 = vset.pattern.permute.xlu0 0
    %85 = vperm.xlu0 %84, %v40
    %v86 = vpop.permute.xlu0 %85
    %89 = vset.pattern.permute.xlu0 0
    %90 = vperm.xlu0 %89, %v41
    %v91 = vpop.permute.xlu0 %90
    %94 = vset.pattern.permute.xlu0 0
    %95 = vperm.xlu0 %94, %v42
    %v96 = vpop.permute.xlu0 %95
    %99 = vset.pattern.permute.xlu0 0
    %100 = vperm.xlu0 %99, %v43
    %v101 = vpop.permute.xlu0 %100
    %104 = vset.pattern.permute.xlu0 0
    %105 = vperm.xlu0 %104, %v44
    %v106 = vpop.permute.xlu0 %105
    %v109 = vlaneseq
    %v110 = vshrl.u32 %v109, 7
    %v111 = vsub.s32 0, %v110
    %v112 = vrot.slane %v45, %v111
    %v113 = vlaneseq
    %v114 = vshrl.u32 %v113, 7
    %v115 = vsub.s32 2, %v114
    %v116 = vrot.slane %v45, %v115
    %v117 = vlaneseq
    %v118 = vshrl.u32 %v117, 7
    %v119 = vsub.s32 4, %v118
    %v120 = vrot.slane %v45, %v119
    %v121 = vlaneseq
    %v122 = vshrl.u32 %v121, 7
    %v123 = vsub.s32 6, %v122
    %v124 = vrot.slane %v45, %v123
    %v129 = vlaneseq
    %v130 = vshrl.u32 %v129, 7
    %v131 = vsub.s32 0, %v130
    %v132 = vrot.slane %v112, %v131
    %v133 = vlaneseq
    %v134 = vshrl.u32 %v133, 7
    %v135 = vsub.s32 0, %v134
    %v136 = vrot.slane %v116, %v135
    %v137 = vlaneseq
    %v138 = vshrl.u32 %v137, 7
    %v139 = vsub.s32 0, %v138
    %v140 = vrot.slane %v120, %v139
    %v141 = vlaneseq
    %v142 = vshrl.u32 %v141, 7
    %v143 = vsub.s32 0, %v142
    %v144 = vrot.slane %v124, %v143
    %v145 = vmul.f32 %v71, %v132
    %v146 = vmul.f32 %v71, %v136
    %v147 = vmul.f32 %v71, %v140
    %v148 = vmul.f32 %v71, %v144
    %v149 = vmul.f32 %v76, %v132
    %v150 = vmul.f32 %v76, %v136
    %v151 = vmul.f32 %v76, %v140
    %v152 = vmul.f32 %v76, %v144
    %v153 = vmul.f32 %v81, %v132
    %v154 = vmul.f32 %v81, %v136
    %v155 = vmul.f32 %v81, %v140
    %v156 = vmul.f32 %v81, %v144
    %v157 = vmul.f32 %v86, %v132
    %v158 = vmul.f32 %v86, %v136
    %v159 = vmul.f32 %v86, %v140
    %v160 = vmul.f32 %v86, %v144
    %v161 = vmul.f32 %v91, %v132
    %v162 = vmul.f32 %v91, %v136
    %v163 = vmul.f32 %v91, %v140
    %v164 = vmul.f32 %v91, %v144
    %v165 = vmul.f32 %v96, %v132
    %v166 = vmul.f32 %v96, %v136
    %v167 = vmul.f32 %v96, %v140
    %v168 = vmul.f32 %v96, %v144
    %v169 = vmul.f32 %v101, %v132
    %v170 = vmul.f32 %v101, %v136
    %v171 = vmul.f32 %v101, %v140
    %v172 = vmul.f32 %v101, %v144
    %v173 = vmul.f32 %v106, %v132
    %v174 = vmul.f32 %v106, %v136
    %v175 = vmul.f32 %v106, %v140
    %v176 = vmul.f32 %v106, %v144
    %v177 = vadd.f32 %v51, %v145
    %v178 = vadd.f32 %v55, %v146
    %v179 = vadd.f32 %v59, %v147
    %v180 = vadd.f32 %v63, %v148
    %v181 = vadd.f32 %v51, %v149
    %v182 = vadd.f32 %v55, %v150
    %v183 = vadd.f32 %v59, %v151
    %v184 = vadd.f32 %v63, %v152
    %v185 = vadd.f32 %v51, %v153
    %v186 = vadd.f32 %v55, %v154
    %v187 = vadd.f32 %v59, %v155
    %v188 = vadd.f32 %v63, %v156
    %v189 = vadd.f32 %v51, %v157
    %v190 = vadd.f32 %v55, %v158
    %v191 = vadd.f32 %v59, %v159
    %v192 = vadd.f32 %v63, %v160
    %v193 = vadd.f32 %v51, %v161
    %v194 = vadd.f32 %v55, %v162
    %v195 = vadd.f32 %v59, %v163
    %v196 = vadd.f32 %v63, %v164
    %v197 = vadd.f32 %v51, %v165
    %v198 = vadd.f32 %v55, %v166
    %v199 = vadd.f32 %v59, %v167
    %v200 = vadd.f32 %v63, %v168
    %v201 = vadd.f32 %v51, %v169
    %v202 = vadd.f32 %v55, %v170
    %v203 = vadd.f32 %v59, %v171
    %v204 = vadd.f32 %v63, %v172
    %v205 = vadd.f32 %v51, %v173
    %v206 = vadd.f32 %v55, %v174
    %v207 = vadd.f32 %v59, %v175
    %v208 = vadd.f32 %v63, %v176
    %209 = vset.pattern.permute.xlu0 1
    %210 = vperm.xlu0 %209, %v37
    %v211 = vpop.permute.xlu0 %210
    %213 = vset.pattern.permute.xlu0 1
    %214 = vperm.xlu0 %213, %v38
    %v215 = vpop.permute.xlu0 %214
    %217 = vset.pattern.permute.xlu0 1
    %218 = vperm.xlu0 %217, %v39
    %v219 = vpop.permute.xlu0 %218
    %221 = vset.pattern.permute.xlu0 1
    %222 = vperm.xlu0 %221, %v40
    %v223 = vpop.permute.xlu0 %222
    %225 = vset.pattern.permute.xlu0 1
    %226 = vperm.xlu0 %225, %v41
    %v227 = vpop.permute.xlu0 %226
    %229 = vset.pattern.permute.xlu0 1
    %230 = vperm.xlu0 %229, %v42
    %v231 = vpop.permute.xlu0 %230
    %233 = vset.pattern.permute.xlu0 1
    %234 = vperm.xlu0 %233, %v43
    %v235 = vpop.permute.xlu0 %234
    %237 = vset.pattern.permute.xlu0 1
    %238 = vperm.xlu0 %237, %v44
    %v239 = vpop.permute.xlu0 %238
    %v241 = vlaneseq
    %v242 = vshrl.u32 %v241, 7
    %v243 = vsub.s32 1, %v242
    %v244 = vrot.slane %v45, %v243
    %v245 = vlaneseq
    %v246 = vshrl.u32 %v245, 7
    %v247 = vsub.s32 3, %v246
    %v248 = vrot.slane %v45, %v247
    %v249 = vlaneseq
    %v250 = vshrl.u32 %v249, 7
    %v251 = vsub.s32 5, %v250
    %v252 = vrot.slane %v45, %v251
    %v253 = vlaneseq
    %v254 = vshrl.u32 %v253, 7
    %v255 = vsub.s32 7, %v254
    %v256 = vrot.slane %v45, %v255
    %v261 = vlaneseq
    %v262 = vshrl.u32 %v261, 7
    %v263 = vsub.s32 1, %v262
    %v264 = vrot.slane %v244, %v263
    %v265 = vlaneseq
    %v266 = vshrl.u32 %v265, 7
    %v267 = vsub.s32 1, %v266
    %v268 = vrot.slane %v248, %v267
    %v269 = vlaneseq
    %v270 = vshrl.u32 %v269, 7
    %v271 = vsub.s32 1, %v270
    %v272 = vrot.slane %v252, %v271
    %v273 = vlaneseq
    %v274 = vshrl.u32 %v273, 7
    %v275 = vsub.s32 1, %v274
    %v276 = vrot.slane %v256, %v275
    %v277 = vmul.f32 %v211, %v264
    %v278 = vmul.f32 %v211, %v268
    %v279 = vmul.f32 %v211, %v272
    %v280 = vmul.f32 %v211, %v276
    %v281 = vmul.f32 %v215, %v264
    %v282 = vmul.f32 %v215, %v268
    %v283 = vmul.f32 %v215, %v272
    %v284 = vmul.f32 %v215, %v276
    %v285 = vmul.f32 %v219, %v264
    %v286 = vmul.f32 %v219, %v268
    %v287 = vmul.f32 %v219, %v272
    %v288 = vmul.f32 %v219, %v276
    %v289 = vmul.f32 %v223, %v264
    %v290 = vmul.f32 %v223, %v268
    %v291 = vmul.f32 %v223, %v272
    %v292 = vmul.f32 %v223, %v276
    %v293 = vmul.f32 %v227, %v264
    %v294 = vmul.f32 %v227, %v268
    %v295 = vmul.f32 %v227, %v272
    %v296 = vmul.f32 %v227, %v276
    %v297 = vmul.f32 %v231, %v264
    %v298 = vmul.f32 %v231, %v268
    %v299 = vmul.f32 %v231, %v272
    %v300 = vmul.f32 %v231, %v276
    %v301 = vmul.f32 %v235, %v264
    %v302 = vmul.f32 %v235, %v268
    %v303 = vmul.f32 %v235, %v272
    %v304 = vmul.f32 %v235, %v276
    %v305 = vmul.f32 %v239, %v264
    %v306 = vmul.f32 %v239, %v268
    %v307 = vmul.f32 %v239, %v272
    %v308 = vmul.f32 %v239, %v276
    %v309 = vadd.f32 %v177, %v277
    %v310 = vadd.f32 %v178, %v278
    %v311 = vadd.f32 %v179, %v279
    %v312 = vadd.f32 %v180, %v280
    %v313 = vadd.f32 %v181, %v281
    %v314 = vadd.f32 %v182, %v282
    %v315 = vadd.f32 %v183, %v283
    %v316 = vadd.f32 %v184, %v284
    %v317 = vadd.f32 %v185, %v285
    %v318 = vadd.f32 %v186, %v286
    %v319 = vadd.f32 %v187, %v287
    %v320 = vadd.f32 %v188, %v288
    %v321 = vadd.f32 %v189, %v289
    %v322 = vadd.f32 %v190, %v290
    %v323 = vadd.f32 %v191, %v291
    %v324 = vadd.f32 %v192, %v292
    %v325 = vadd.f32 %v193, %v293
    %v326 = vadd.f32 %v194, %v294
    %v327 = vadd.f32 %v195, %v295
    %v328 = vadd.f32 %v196, %v296
    %v329 = vadd.f32 %v197, %v297
    %v330 = vadd.f32 %v198, %v298
    %v331 = vadd.f32 %v199, %v299
    %v332 = vadd.f32 %v200, %v300
    %v333 = vadd.f32 %v201, %v301
    %v334 = vadd.f32 %v202, %v302
    %v335 = vadd.f32 %v203, %v303
    %v336 = vadd.f32 %v204, %v304
    %v337 = vadd.f32 %v205, %v305
    %v338 = vadd.f32 %v206, %v306
    %v339 = vadd.f32 %v207, %v307
    %v340 = vadd.f32 %v208, %v308
    %341 = vst [vmem:[#allocation2] sm:$0xff] %v309
    %342 = vst [vmem:[#allocation2 + $0x8] sm:$0xff] %v310
    %343 = vst [vmem:[#allocation2 + $0x10] sm:$0xff] %v311
    %344 = vst [vmem:[#allocation2 + $0x18] sm:$0xff] %v312
    %345 = vst [vmem:[#allocation2 + $0x20] sm:$0xff] %v313
    %346 = vst [vmem:[#allocation2 + $0x28] sm:$0xff] %v314
    %347 = vst [vmem:[#allocation2 + $0x30] sm:$0xff] %v315
    %348 = vst [vmem:[#allocation2 + $0x38] sm:$0xff] %v316
    %349 = vst [vmem:[#allocation2 + $0x40] sm:$0xff] %v317
    %350 = vst [vmem:[#allocation2 + $0x48] sm:$0xff] %v318
    %351 = vst [vmem:[#allocation2 + $0x50] sm:$0xff] %v319
    %352 = vst [vmem:[#allocation2 + $0x58] sm:$0xff] %v320
    %353 = vst [vmem:[#allocation2 + $0x60] sm:$0xff] %v321
    %354 = vst [vmem:[#allocation2 + $0x68] sm:$0xff] %v322
    %355 = vst [vmem:[#allocation2 + $0x70] sm:$0xff] %v323
    %356 = vst [vmem:[#allocation2 + $0x78] sm:$0xff] %v324
    %357 = vst [vmem:[#allocation2 + $0x80] sm:$0xff] %v325
    %358 = vst [vmem:[#allocation2 + $0x88] sm:$0xff] %v326
    %359 = vst [vmem:[#allocation2 + $0x90] sm:$0xff] %v327
    %360 = vst [vmem:[#allocation2 + $0x98] sm:$0xff] %v328
    %361 = vst [vmem:[#allocation2 + $0xa0] sm:$0xff] %v329
    %362 = vst [vmem:[#allocation2 + $0xa8] sm:$0xff] %v330
    %363 = vst [vmem:[#allocation2 + $0xb0] sm:$0xff] %v331
    %364 = vst [vmem:[#allocation2 + $0xb8] sm:$0xff] %v332
    %365 = vst [vmem:[#allocation2 + $0xc0] sm:$0xff] %v333
    %366 = vst [vmem:[#allocation2 + $0xc8] sm:$0xff] %v334
    %367 = vst [vmem:[#allocation2 + $0xd0] sm:$0xff] %v335
    %368 = vst [vmem:[#allocation2 + $0xd8] sm:$0xff] %v336
    %369 = vst [vmem:[#allocation2 + $0xe0] sm:$0xff] %v337
    %370 = vst [vmem:[#allocation2 + $0xe8] sm:$0xff] %v338
    %371 = vst [vmem:[#allocation2 + $0xf0] sm:$0xff] %v339
    %372 = vst [vmem:[#allocation2 + $0xf8] sm:$0xff] %v340
    %v373 = vld [vmem:[#allocation2] sm:$0xff]
    %v374 = vld [vmem:[#allocation2 + $0x8] sm:$0xff]
    %v375 = vld [vmem:[#allocation2 + $0x10] sm:$0xff]
    %v376 = vld [vmem:[#allocation2 + $0x18] sm:$0xff]
    %v377 = vld [vmem:[#allocation3] sm:$0xff]
    %v378 = vld [vmem:[#allocation3 + $0x8] sm:$0xff]
    %v379 = vld [vmem:[#allocation3 + $0x10] sm:$0xff]
    %v380 = vld [vmem:[#allocation3 + $0x18] sm:$0xff]
    %v381 = vld [vmem:[#allocation3 + $0x20] sm:$0xff]
    %v382 = vld [vmem:[#allocation3 + $0x28] sm:$0xff]
    %v383 = vld [vmem:[#allocation3 + $0x30] sm:$0xff]
    %v384 = vld [vmem:[#allocation3 + $0x38] sm:$0xff]
    %v385 = vld [vmem:[#allocation3 + $0x40] sm:$0xff]
    %v386 = vld [vmem:[#allocation3 + $0x48] sm:$0xff]
    %v387 = vld [vmem:[#allocation3 + $0x50] sm:$0xff]
    %v388 = vld [vmem:[#allocation3 + $0x58] sm:$0xff]
    %v389 = vld [vmem:[#allocation3 + $0x60] sm:$0xff]
    %v390 = vld [vmem:[#allocation3 + $0x68] sm:$0xff]
    %v391 = vld [vmem:[#allocation3 + $0x70] sm:$0xff]
    %v392 = vld [vmem:[#allocation3 + $0x78] sm:$0xff]
    %v393 = vld [vmem:[#allocation3 + $0x80] sm:$0xff]
    %v394 = vld [vmem:[#allocation3 + $0x88] sm:$0xff]
    %v395 = vld [vmem:[#allocation3 + $0x90] sm:$0xff]
    %v396 = vld [vmem:[#allocation3 + $0x98] sm:$0xff]
    %v397 = vld [vmem:[#allocation3 + $0xa0] sm:$0xff]
    %v398 = vld [vmem:[#allocation3 + $0xa8] sm:$0xff]
    %v399 = vld [vmem:[#allocation3 + $0xb0] sm:$0xff]
    %v400 = vld [vmem:[#allocation3 + $0xb8] sm:$0xff]
    %v401 = vld [vmem:[#allocation3 + $0xc0] sm:$0xff]
    %v402 = vld [vmem:[#allocation3 + $0xc8] sm:$0xff]
    %v403 = vld [vmem:[#allocation3 + $0xd0] sm:$0xff]
    %v404 = vld [vmem:[#allocation3 + $0xd8] sm:$0xff]
    %v405 = vld [vmem:[#allocation3 + $0xe0] sm:$0xff]
    %v406 = vld [vmem:[#allocation3 + $0xe8] sm:$0xff]
    %v407 = vld [vmem:[#allocation3 + $0xf0] sm:$0xff]
    %v408 = vld [vmem:[#allocation3 + $0xf8] sm:$0xff]
    %v409 = vld [vmem:[#allocation3 + $0x100] sm:$0xff]
    %v410 = vld [vmem:[#allocation3 + $0x108] sm:$0xff]
    %v411 = vld [vmem:[#allocation3 + $0x110] sm:$0xff]
    %v412 = vld [vmem:[#allocation3 + $0x118] sm:$0xff]
    %v413 = vld [vmem:[#allocation3 + $0x120] sm:$0xff]
    %v414 = vld [vmem:[#allocation3 + $0x128] sm:$0xff]
    %v415 = vld [vmem:[#allocation3 + $0x130] sm:$0xff]
    %v416 = vld [vmem:[#allocation3 + $0x138] sm:$0xff]
    %v417 = vld [vmem:[#allocation3 + $0x140] sm:$0xff]
    %v418 = vld [vmem:[#allocation3 + $0x148] sm:$0xff]
    %v419 = vld [vmem:[#allocation3 + $0x150] sm:$0xff]
    %v420 = vld [vmem:[#allocation3 + $0x158] sm:$0xff]
    %v421 = vld [vmem:[#allocation3 + $0x160] sm:$0xff]
    %v422 = vld [vmem:[#allocation3 + $0x168] sm:$0xff]
    %v423 = vld [vmem:[#allocation3 + $0x170] sm:$0xff]
    %v424 = vld [vmem:[#allocation3 + $0x178] sm:$0xff]
    %v425 = vld [vmem:[#allocation3 + $0x180] sm:$0xff]
    %v426 = vld [vmem:[#allocation3 + $0x188] sm:$0xff]
    %v427 = vld [vmem:[#allocation3 + $0x190] sm:$0xff]
    %v428 = vld [vmem:[#allocation3 + $0x198] sm:$0xff]
    %v429 = vld [vmem:[#allocation3 + $0x1a0] sm:$0xff]
    %v430 = vld [vmem:[#allocation3 + $0x1a8] sm:$0xff]
    %v431 = vld [vmem:[#allocation3 + $0x1b0] sm:$0xff]
    %v432 = vld [vmem:[#allocation3 + $0x1b8] sm:$0xff]
    %v433 = vld [vmem:[#allocation3 + $0x1c0] sm:$0xff]
    %v434 = vld [vmem:[#allocation3 + $0x1c8] sm:$0xff]
    %v435 = vld [vmem:[#allocation3 + $0x1d0] sm:$0xff]
    %v436 = vld [vmem:[#allocation3 + $0x1d8] sm:$0xff]
    %v437 = vld [vmem:[#allocation3 + $0x1e0] sm:$0xff]
    %v438 = vld [vmem:[#allocation3 + $0x1e8] sm:$0xff]
    %v439 = vld [vmem:[#allocation3 + $0x1f0] sm:$0xff]
    %v440 = vld [vmem:[#allocation3 + $0x1f8] sm:$0xff]
    %441 = vmatprep.subr.mxu0 %v378
    %442 = vmatpush1.msra.mxu0 %v377
    %443 = vmatprep.subr.mxu0 %v382
    %444 = vmatpush1.msra.mxu0 %v381
    %445 = vmatprep.subr.mxu0 %v386
    %446 = vmatpush1.msra.mxu0 %v385
    %447 = vmatprep.subr.mxu0 %v390
    %448 = vmatpush1.msra.mxu0 %v389
    %449 = vmatprep.subr.mxu0 %v394
    %450 = vmatpush1.msra.mxu0 %v393
    %451 = vmatprep.subr.mxu0 %v398
    %452 = vmatpush1.msra.mxu0 %v397
    %453 = vmatprep.subr.mxu0 %v402
    %454 = vmatpush1.msra.mxu0 %v401
    %455 = vmatprep.subr.mxu0 %v406
    %456 = vmatpush1.msra.mxu0 %v405
    %457 = vmatprep.subr.mxu0 %v410
    %458 = vmatpush1.msra.mxu0 %v409
    %459 = vmatprep.subr.mxu0 %v414
    %460 = vmatpush1.msra.mxu0 %v413
    %461 = vmatprep.subr.mxu0 %v418
    %462 = vmatpush1.msra.mxu0 %v417
    %463 = vmatprep.subr.mxu0 %v422
    %464 = vmatpush1.msra.mxu0 %v421
    %465 = vmatprep.subr.mxu0 %v426
    %466 = vmatpush1.msra.mxu0 %v425
    %467 = vmatprep.subr.mxu0 %v430
    %468 = vmatpush1.msra.mxu0 %v429
    %469 = vmatprep.subr.mxu0 %v434
    %470 = vmatpush1.msra.mxu0 %v433
    %471 = vmatprep.subr.mxu0 %v438
    %472 = vmatpush1.msra.mxu0 %v437
    %473 = vmatprep.subr.mxu0 0.0
    %474 = vmatpush1.msra.mxu0 0.0
    %475 = vmatprep.subr.mxu0 0.0
    %476 = vmatpush1.msra.mxu0 0.0
    %477 = vmatprep.subr.mxu0 0.0
    %478 = vmatpush1.msra.mxu0 0.0
    %479 = vmatprep.subr.mxu0 0.0
    %480 = vmatpush1.msra.mxu0 0.0
    %481 = vmatprep.subr.mxu0 0.0
    %482 = vmatpush1.msra.mxu0 0.0
    %483 = vmatprep.subr.mxu0 0.0
    %484 = vmatpush1.msra.mxu0 0.0
    %485 = vmatprep.subr.mxu0 0.0
    %486 = vmatpush1.msra.mxu0 0.0
    %487 = vmatprep.subr.mxu0 0.0
    %488 = vmatpush1.msra.mxu0 0.0
    %489 = vmatprep.subr.mxu0 0.0
    %490 = vmatpush1.msra.mxu0 0.0
    %491 = vmatprep.subr.mxu0 0.0
    %492 = vmatpush1.msra.mxu0 0.0
    %493 = vmatprep.subr.mxu0 0.0
    %494 = vmatpush1.msra.mxu0 0.0
    %495 = vmatprep.subr.mxu0 0.0
    %496 = vmatpush1.msra.mxu0 0.0
    %497 = vmatprep.subr.mxu0 0.0
    %498 = vmatpush1.msra.mxu0 0.0
    %499 = vmatprep.subr.mxu0 0.0
    %500 = vmatpush1.msra.mxu0 0.0
    %501 = vmatprep.subr.mxu0 0.0
    %502 = vmatpush1.msra.mxu0 0.0
    %503 = vmatprep.subr.mxu0 0.0
    %504 = vmatpush1.msra.mxu0 0.0
    %505 = vmatprep.mubr.f32.mxu0 0.0
    %506 = vmatmul.mubr.f32.gmra.mrb[0].mxu0 0.0
    %v507 = vpop.f32.mrb[0].mxu0
    %v508 = vadd.f32 0.0, %v507
    %v509 = vpop.f32.mrb[0].mxu0
    %v510 = vadd.f32 0.0, %v509
    %511 = vdwg.mxu0
    %512 = vmatprep.subr.mxu0 %v380
    %513 = vmatpush1.msra.mxu0 %v379
    %514 = vmatprep.subr.mxu0 %v384
    %515 = vmatpush1.msra.mxu0 %v383
    %516 = vmatprep.subr.mxu0 %v388
    %517 = vmatpush1.msra.mxu0 %v387
    %518 = vmatprep.subr.mxu0 %v392
    %519 = vmatpush1.msra.mxu0 %v391
    %520 = vmatprep.subr.mxu0 %v396
    %521 = vmatpush1.msra.mxu0 %v395
    %522 = vmatprep.subr.mxu0 %v400
    %523 = vmatpush1.msra.mxu0 %v399
    %524 = vmatprep.subr.mxu0 %v404
    %525 = vmatpush1.msra.mxu0 %v403
    %526 = vmatprep.subr.mxu0 %v408
    %527 = vmatpush1.msra.mxu0 %v407
    %528 = vmatprep.subr.mxu0 %v412
    %529 = vmatpush1.msra.mxu0 %v411
    %530 = vmatprep.subr.mxu0 %v416
    %531 = vmatpush1.msra.mxu0 %v415
    %532 = vmatprep.subr.mxu0 %v420
    %533 = vmatpush1.msra.mxu0 %v419
    %534 = vmatprep.subr.mxu0 %v424
    %535 = vmatpush1.msra.mxu0 %v423
    %536 = vmatprep.subr.mxu0 %v428
    %537 = vmatpush1.msra.mxu0 %v427
    %538 = vmatprep.subr.mxu0 %v432
    %539 = vmatpush1.msra.mxu0 %v431
    %540 = vmatprep.subr.mxu0 %v436
    %541 = vmatpush1.msra.mxu0 %v435
    %542 = vmatprep.subr.mxu0 %v440
    %543 = vmatpush1.msra.mxu0 %v439
    %544 = vmatprep.subr.mxu0 0.0
    %545 = vmatpush1.msra.mxu0 0.0
    %546 = vmatprep.subr.mxu0 0.0
    %547 = vmatpush1.msra.mxu0 0.0
    %548 = vmatprep.subr.mxu0 0.0
    %549 = vmatpush1.msra.mxu0 0.0
    %550 = vmatprep.subr.mxu0 0.0
    %551 = vmatpush1.msra.mxu0 0.0
    %552 = vmatprep.subr.mxu0 0.0
    %553 = vmatpush1.msra.mxu0 0.0
    %554 = vmatprep.subr.mxu0 0.0
    %555 = vmatpush1.msra.mxu0 0.0
    %556 = vmatprep.subr.mxu0 0.0
    %557 = vmatpush1.msra.mxu0 0.0
    %558 = vmatprep.subr.mxu0 0.0
    %559 = vmatpush1.msra.mxu0 0.0
    %560 = vmatprep.subr.mxu0 0.0
    %561 = vmatpush1.msra.mxu0 0.0
    %562 = vmatprep.subr.mxu0 0.0
    %563 = vmatpush1.msra.mxu0 0.0
    %564 = vmatprep.subr.mxu0 0.0
    %565 = vmatpush1.msra.mxu0 0.0
    %566 = vmatprep.subr.mxu0 0.0
    %567 = vmatpush1.msra.mxu0 0.0
    %568 = vmatprep.subr.mxu0 0.0
    %569 = vmatpush1.msra.mxu0 0.0
    %570 = vmatprep.subr.mxu0 0.0
    %571 = vmatpush1.msra.mxu0 0.0
    %572 = vmatprep.subr.mxu0 0.0
    %573 = vmatpush1.msra.mxu0 0.0
    %574 = vmatprep.subr.mxu0 0.0
    %575 = vmatpush1.msra.mxu0 0.0
    %576 = vmatprep.mubr.f32.mxu0 0.0
    %577 = vmatmul.mubr.f32.gmra.mrb[0].mxu0 0.0
    %v578 = vpop.f32.mrb[0].mxu0
    %v579 = vadd.f32 0.0, %v578
    %v580 = vpop.f32.mrb[0].mxu0
    %v581 = vadd.f32 0.0, %v580
    %582 = vdwg.mxu0
    %v583 = vadd.f32 %v373, %v508
    %v584 = vadd.f32 %v374, %v510
    %v585 = vadd.f32 %v375, %v579
    %v586 = vadd.f32 %v376, %v581
    %v587 = vmul.f32 %v583, 0.5
    %v588 = vmul.f32 %v584, 0.5
    %v589 = vmul.f32 %v585, 0.5
    %v590 = vtanh.pop %v587
    %v591 = vtanh.pop %v588
    %v592 = vtanh.pop %v589
    %v593 = vmul.f32 %v590, 0.5
    %v594 = vmul.f32 %v591, 0.5
    %v595 = vmul.f32 %v592, 0.5
    %v596 = vadd.f32 %v593, 0.5
    %v597 = vadd.f32 %v594, 0.5
    %v598 = vadd.f32 %v595, 0.5
    %v599 = vtanh.pop %v586
    %v600 = vmul.f32 %v597, 0.0
    %v601 = vmul.f32 %v596, %v599
    %v602 = vadd.f32 %v600, %v601
    %v603 = vtanh.pop %v602
    %v604 = vmul.f32 %v598, %v603
    %v605 = vld [vmem:[#allocation2 + $0x20] sm:$0xff]
    %v606 = vld [vmem:[#allocation2 + $0x28] sm:$0xff]
    %v607 = vld [vmem:[#allocation2 + $0x30] sm:$0xff]
    %v608 = vld [vmem:[#allocation2 + $0x38] sm:$0xff]
    %609 = vmatprep.subr.mxu0 %v378
    %610 = vmatpush1.msra.mxu0 %v377
    %611 = vmatprep.subr.mxu0 %v382
    %612 = vmatpush1.msra.mxu0 %v381
    %613 = vmatprep.subr.mxu0 %v386
    %614 = vmatpush1.msra.mxu0 %v385
    %615 = vmatprep.subr.mxu0 %v390
    %616 = vmatpush1.msra.mxu0 %v389
    %617 = vmatprep.subr.mxu0 %v394
    %618 = vmatpush1.msra.mxu0 %v393
    %619 = vmatprep.subr.mxu0 %v398
    %620 = vmatpush1.msra.mxu0 %v397
    %621 = vmatprep.subr.mxu0 %v402
    %622 = vmatpush1.msra.mxu0 %v401
    %623 = vmatprep.subr.mxu0 %v406
    %624 = vmatpush1.msra.mxu0 %v405
    %625 = vmatprep.subr.mxu0 %v410
    %626 = vmatpush1.msra.mxu0 %v409
    %627 = vmatprep.subr.mxu0 %v414
    %628 = vmatpush1.msra.mxu0 %v413
    %629 = vmatprep.subr.mxu0 %v418
    %630 = vmatpush1.msra.mxu0 %v417
    %631 = vmatprep.subr.mxu0 %v422
    %632 = vmatpush1.msra.mxu0 %v421
    %633 = vmatprep.subr.mxu0 %v426
    %634 = vmatpush1.msra.mxu0 %v425
    %635 = vmatprep.subr.mxu0 %v430
    %636 = vmatpush1.msra.mxu0 %v429
    %637 = vmatprep.subr.mxu0 %v434
    %638 = vmatpush1.msra.mxu0 %v433
    %639 = vmatprep.subr.mxu0 %v438
    %640 = vmatpush1.msra.mxu0 %v437
    %641 = vmatprep.subr.mxu0 0.0
    %642 = vmatpush1.msra.mxu0 0.0
    %643 = vmatprep.subr.mxu0 0.0
    %644 = vmatpush1.msra.mxu0 0.0
    %645 = vmatprep.subr.mxu0 0.0
    %646 = vmatpush1.msra.mxu0 0.0
    %647 = vmatprep.subr.mxu0 0.0
    %648 = vmatpush1.msra.mxu0 0.0
    %649 = vmatprep.subr.mxu0 0.0
    %650 = vmatpush1.msra.mxu0 0.0
    %651 = vmatprep.subr.mxu0 0.0
    %652 = vmatpush1.msra.mxu0 0.0
    %653 = vmatprep.subr.mxu0 0.0
    %654 = vmatpush1.msra.mxu0 0.0
    %655 = vmatprep.subr.mxu0 0.0
    %656 = vmatpush1.msra.mxu0 0.0
    %657 = vmatprep.subr.mxu0 0.0
    %658 = vmatpush1.msra.mxu0 0.0
    %659 = vmatprep.subr.mxu0 0.0
    %660 = vmatpush1.msra.mxu0 0.0
    %661 = vmatprep.subr.mxu0 0.0
    %662 = vmatpush1.msra.mxu0 0.0
    %663 = vmatprep.subr.mxu0 0.0
    %664 = vmatpush1.msra.mxu0 0.0
    %665 = vmatprep.subr.mxu0 0.0
    %666 = vmatpush1.msra.mxu0 0.0
    %667 = vmatprep.subr.mxu0 0.0
    %668 = vmatpush1.msra.mxu0 0.0
    %669 = vmatprep.subr.mxu0 0.0
    %670 = vmatpush1.msra.mxu0 0.0
    %671 = vmatprep.subr.mxu0 0.0
    %672 = vmatpush1.msra.mxu0 0.0
    %673 = vmatprep.mubr.f32.mxu0 0.0
    %674 = vmatmul.mubr.f32.gmra.mrb[0].mxu0 %v604
    %v675 = vpop.f32.mrb[0].mxu0
    %v676 = vadd.f32 0.0, %v675
    %v677 = vpop.f32.mrb[0].mxu0
    %v678 = vadd.f32 0.0, %v677
    %679 = vdwg.mxu0
    %680 = vmatprep.subr.mxu0 %v380
    %681 = vmatpush1.msra.mxu0 %v379
    %682 = vmatprep.subr.mxu0 %v384
    %683 = vmatpush1.msra.mxu0 %v383
    %684 = vmatprep.subr.mxu0 %v388
    %685 = vmatpush1.msra.mxu0 %v387
    %686 = vmatprep.subr.mxu0 %v392
    %687 = vmatpush1.msra.mxu0 %v391
    %688 = vmatprep.subr.mxu0 %v396
    %689 = vmatpush1.msra.mxu0 %v395
    %690 = vmatprep.subr.mxu0 %v400
    %691 = vmatpush1.msra.mxu0 %v399
    %692 = vmatprep.subr.mxu0 %v404
    %693 = vmatpush1.msra.mxu0 %v403
    %694 = vmatprep.subr.mxu0 %v408
    %695 = vmatpush1.msra.mxu0 %v407
    %696 = vmatprep.subr.mxu0 %v412
    %697 = vmatpush1.msra.mxu0 %v411
    %698 = vmatprep.subr.mxu0 %v416
    %699 = vmatpush1.msra.mxu0 %v415
    %700 = vmatprep.subr.mxu0 %v420
    %701 = vmatpush1.msra.mxu0 %v419
    %702 = vmatprep.subr.mxu0 %v424
    %703 = vmatpush1.msra.mxu0 %v423
    %704 = vmatprep.subr.mxu0 %v428
    %705 = vmatpush1.msra.mxu0 %v427
    %706 = vmatprep.subr.mxu0 %v432
    %707 = vmatpush1.msra.mxu0 %v431
    %708 = vmatprep.subr.mxu0 %v436
    %709 = vmatpush1.msra.mxu0 %v435
    %710 = vmatprep.subr.mxu0 %v440
    %711 = vmatpush1.msra.mxu0 %v439
    %712 = vmatprep.subr.mxu0 0.0
    %713 = vmatpush1.msra.mxu0 0.0
    %714 = vmatprep.subr.mxu0 0.0
    %715 = vmatpush1.msra.mxu0 0.0
    %716 = vmatprep.subr.mxu0 0.0
    %717 = vmatpush1.msra.mxu0 0.0
    %718 = vmatprep.subr.mxu0 0.0
    %719 = vmatpush1.msra.mxu0 0.0
    %720 = vmatprep.subr.mxu0 0.0
    %721 = vmatpush1.msra.mxu0 0.0
    %722 = vmatprep.subr.mxu0 0.0
    %723 = vmatpush1.msra.mxu0 0.0
    %724 = vmatprep.subr.mxu0 0.0
    %725 = vmatpush1.msra.mxu0 0.0
    %726 = vmatprep.subr.mxu0 0.0
    %727 = vmatpush1.msra.mxu0 0.0
    %728 = vmatprep.subr.mxu0 0.0
    %729 = vmatpush1.msra.mxu0 0.0
    %730 = vmatprep.subr.mxu0 0.0
    %731 = vmatpush1.msra.mxu0 0.0
    %732 = vmatprep.subr.mxu0 0.0
    %733 = vmatpush1.msra.mxu0 0.0
    %734 = vmatprep.subr.mxu0 0.0
    %735 = vmatpush1.msra.mxu0 0.0
    %736 = vmatprep.subr.mxu0 0.0
    %737 = vmatpush1.msra.mxu0 0.0
    %738 = vmatprep.subr.mxu0 0.0
    %739 = vmatpush1.msra.mxu0 0.0
    %740 = vmatprep.subr.mxu0 0.0
    %741 = vmatpush1.msra.mxu0 0.0
    %742 = vmatprep.subr.mxu0 0.0
    %743 = vmatpush1.msra.mxu0 0.0
    %744 = vmatprep.mubr.f32.mxu0 0.0
    %745 = vmatmul.mubr.f32.gmra.mrb[0].mxu0 %v604
    %v746 = vpop.f32.mrb[0].mxu0
    %v747 = vadd.f32 0.0, %v746
    %v748 = vpop.f32.mrb[0].mxu0
    %v749 = vadd.f32 0.0, %v748
    %750 = vdwg.mxu0
    %v751 = vadd.f32 %v605, %v676
    %v752 = vadd.f32 %v606, %v678
    %v753 = vadd.f32 %v607, %v747
    %v754 = vadd.f32 %v608, %v749
    %v755 = vmul.f32 %v751, 0.5
    %v756 = vmul.f32 %v752, 0.5
    %v757 = vmul.f32 %v753, 0.5
    %v758 = vtanh.pop %v755
    %v759 = vtanh.pop %v756
    %v760 = vtanh.pop %v757
    %v761 = vmul.f32 %v758, 0.5
    %v762 = vmul.f32 %v759, 0.5
    %v763 = vmul.f32 %v760, 0.5
    %v764 = vadd.f32 %v761, 0.5
    %v765 = vadd.f32 %v762, 0.5
    %v766 = vadd.f32 %v763, 0.5
    %v767 = vtanh.pop %v754
    %v768 = vmul.f32 %v765, %v602
    %v769 = vmul.f32 %v764, %v767
    %v770 = vadd.f32 %v768, %v769
    %v771 = vtanh.pop %v770
    %v772 = vmul.f32 %v766, %v771
    %v773 = vld [vmem:[#allocation2 + $0x40] sm:$0xff]
    %v774 = vld [vmem:[#allocation2 + $0x48] sm:$0xff]
    %v775 = vld [vmem:[#allocation2 + $0x50] sm:$0xff]
    %v776 = vld [vmem:[#allocation2 + $0x58] sm:$0xff]
    %777 = vmatprep.subr.mxu0 %v378
    %778 = vmatpush1.msra.mxu0 %v377
    %779 = vmatprep.subr.mxu0 %v382
    %780 = vmatpush1.msra.mxu0 %v381
    %781 = vmatprep.subr.mxu0 %v386
    %782 = vmatpush1.msra.mxu0 %v385
    %783 = vmatprep.subr.mxu0 %v390
    %784 = vmatpush1.msra.mxu0 %v389
    %785 = vmatprep.subr.mxu0 %v394
    %786 = vmatpush1.msra.mxu0 %v393
    %787 = vmatprep.subr.mxu0 %v398
    %788 = vmatpush1.msra.mxu0 %v397
    %789 = vmatprep.subr.mxu0 %v402
    %790 = vmatpush1.msra.mxu0 %v401
    %791 = vmatprep.subr.mxu0 %v406
    %792 = vmatpush1.msra.mxu0 %v405
    %793 = vmatprep.subr.mxu0 %v410
    %794 = vmatpush1.msra.mxu0 %v409
    %795 = vmatprep.subr.mxu0 %v414
    %796 = vmatpush1.msra.mxu0 %v413
    %797 = vmatprep.subr.mxu0 %v418
    %798 = vmatpush1.msra.mxu0 %v417
    %799 = vmatprep.subr.mxu0 %v422
    %800 = vmatpush1.msra.mxu0 %v421
    %801 = vmatprep.subr.mxu0 %v426
    %802 = vmatpush1.msra.mxu0 %v425
    %803 = vmatprep.subr.mxu0 %v430
    %804 = vmatpush1.msra.mxu0 %v429
    %805 = vmatprep.subr.mxu0 %v434
    %806 = vmatpush1.msra.mxu0 %v433
    %807 = vmatprep.subr.mxu0 %v438
    %808 = vmatpush1.msra.mxu0 %v437
    %809 = vmatprep.subr.mxu0 0.0
    %810 = vmatpush1.msra.mxu0 0.0
    %811 = vmatprep.subr.mxu0 0.0
    %812 = vmatpush1.msra.mxu0 0.0
    %813 = vmatprep.subr.mxu0 0.0
    %814 = vmatpush1.msra.mxu0 0.0
    %815 = vmatprep.subr.mxu0 0.0
    %816 = vmatpush1.msra.mxu0 0.0
    %817 = vmatprep.subr.mxu0 0.0
    %818 = vmatpush1.msra.mxu0 0.0
    %819 = vmatprep.subr.mxu0 0.0
    %820 = vmatpush1.msra.mxu0 0.0
    %821 = vmatprep.subr.mxu0 0.0
    %822 = vmatpush1.msra.mxu0 0.0
    %823 = vmatprep.subr.mxu0 0.0
    %824 = vmatpush1.msra.mxu0 0.0
    %825 = vmatprep.subr.mxu0 0.0
    %826 = vmatpush1.msra.mxu0 0.0
    %827 = vmatprep.subr.mxu0 0.0
    %828 = vmatpush1.msra.mxu0 0.0
    %829 = vmatprep.subr.mxu0 0.0
    %830 = vmatpush1.msra.mxu0 0.0
    %831 = vmatprep.subr.mxu0 0.0
    %832 = vmatpush1.msra.mxu0 0.0
    %833 = vmatprep.subr.mxu0 0.0
    %834 = vmatpush1.msra.mxu0 0.0
    %835 = vmatprep.subr.mxu0 0.0
    %836 = vmatpush1.msra.mxu0 0.0
    %837 = vmatprep.subr.mxu0 0.0
    %838 = vmatpush1.msra.mxu0 0.0
    %839 = vmatprep.subr.mxu0 0.0
    %840 = vmatpush1.msra.mxu0 0.0
    %841 = vmatprep.mubr.f32.mxu0 0.0
    %842 = vmatmul.mubr.f32.gmra.mrb[0].mxu0 %v772
    %v843 = vpop.f32.mrb[0].mxu0
    %v844 = vadd.f32 0.0, %v843
    %v845 = vpop.f32.mrb[0].mxu0
    %v846 = vadd.f32 0.0, %v845
    %847 = vdwg.mxu0
    %848 = vmatprep.subr.mxu0 %v380
    %849 = vmatpush1.msra.mxu0 %v379
    %850 = vmatprep.subr.mxu0 %v384
    %851 = vmatpush1.msra.mxu0 %v383
    %852 = vmatprep.subr.mxu0 %v388
    %853 = vmatpush1.msra.mxu0 %v387
    %854 = vmatprep.subr.mxu0 %v392
    %855 = vmatpush1.msra.mxu0 %v391
    %856 = vmatprep.subr.mxu0 %v396
    %857 = vmatpush1.msra.mxu0 %v395
    %858 = vmatprep.subr.mxu0 %v400
    %859 = vmatpush1.msra.mxu0 %v399
    %860 = vmatprep.subr.mxu0 %v404
    %861 = vmatpush1.msra.mxu0 %v403
    %862 = vmatprep.subr.mxu0 %v408
    %863 = vmatpush1.msra.mxu0 %v407
    %864 = vmatprep.subr.mxu0 %v412
    %865 = vmatpush1.msra.mxu0 %v411
    %866 = vmatprep.subr.mxu0 %v416
    %867 = vmatpush1.msra.mxu0 %v415
    %868 = vmatprep.subr.mxu0 %v420
    %869 = vmatpush1.msra.mxu0 %v419
    %870 = vmatprep.subr.mxu0 %v424
    %871 = vmatpush1.msra.mxu0 %v423
    %872 = vmatprep.subr.mxu0 %v428
    %873 = vmatpush1.msra.mxu0 %v427
    %874 = vmatprep.subr.mxu0 %v432
    %875 = vmatpush1.msra.mxu0 %v431
    %876 = vmatprep.subr.mxu0 %v436
    %877 = vmatpush1.msra.mxu0 %v435
    %878 = vmatprep.subr.mxu0 %v440
    %879 = vmatpush1.msra.mxu0 %v439
    %880 = vmatprep.subr.mxu0 0.0
    %881 = vmatpush1.msra.mxu0 0.0
    %882 = vmatprep.subr.mxu0 0.0
    %883 = vmatpush1.msra.mxu0 0.0
    %884 = vmatprep.subr.mxu0 0.0
    %885 = vmatpush1.msra.mxu0 0.0
    %886 = vmatprep.subr.mxu0 0.0
    %887 = vmatpush1.msra.mxu0 0.0
    %888 = vmatprep.subr.mxu0 0.0
    %889 = vmatpush1.msra.mxu0 0.0
    %890 = vmatprep.subr.mxu0 0.0
    %891 = vmatpush1.msra.mxu0 0.0
    %892 = vmatprep.subr.mxu0 0.0
    %893 = vmatpush1.msra.mxu0 0.0
    %894 = vmatprep.subr.mxu0 0.0
    %895 = vmatpush1.msra.mxu0 0.0
    %896 = vmatprep.subr.mxu0 0.0
    %897 = vmatpush1.msra.mxu0 0.0
    %898 = vmatprep.subr.mxu0 0.0
    %899 = vmatpush1.msra.mxu0 0.0
    %900 = vmatprep.subr.mxu0 0.0
    %901 = vmatpush1.msra.mxu0 0.0
    %902 = vmatprep.subr.mxu0 0.0
    %903 = vmatpush1.msra.mxu0 0.0
    %904 = vmatprep.subr.mxu0 0.0
    %905 = vmatpush1.msra.mxu0 0.0
    %906 = vmatprep.subr.mxu0 0.0
    %907 = vmatpush1.msra.mxu0 0.0
    %908 = vmatprep.subr.mxu0 0.0
    %909 = vmatpush1.msra.mxu0 0.0
    %910 = vmatprep.subr.mxu0 0.0
    %911 = vmatpush1.msra.mxu0 0.0
    %912 = vmatprep.mubr.f32.mxu0 0.0
    %913 = vmatmul.mubr.f32.gmra.mrb[0].mxu0 %v772
    %v914 = vpop.f32.mrb[0].mxu0
    %v915 = vadd.f32 0.0, %v914
    %v916 = vpop.f32.mrb[0].mxu0
    %v917 = vadd.f32 0.0, %v916
    %918 = vdwg.mxu0
    %v919 = vadd.f32 %v773, %v844
    %v920 = vadd.f32 %v774, %v846
    %v921 = vadd.f32 %v775, %v915
    %v922 = vadd.f32 %v776, %v917
    %v923 = vmul.f32 %v919, 0.5
    %v924 = vmul.f32 %v920, 0.5
    %v925 = vmul.f32 %v921, 0.5
    %v926 = vtanh.pop %v923
    %v927 = vtanh.pop %v924
    %v928 = vtanh.pop %v925
    %v929 = vmul.f32 %v926, 0.5
    %v930 = vmul.f32 %v927, 0.5
    %v931 = vmul.f32 %v928, 0.5
    %v932 = vadd.f32 %v929, 0.5
    %v933 = vadd.f32 %v930, 0.5
    %v934 = vadd.f32 %v931, 0.5
    %v935 = vtanh.pop %v922
    %v936 = vmul.f32 %v933, %v770
    %v937 = vmul.f32 %v932, %v935
    %v938 = vadd.f32 %v936, %v937
    %v939 = vtanh.pop %v938
    %v940 = vmul.f32 %v934, %v939
    %v941 = vld [vmem:[#allocation2 + $0x60] sm:$0xff]
    %v942 = vld [vmem:[#allocation2 + $0x68] sm:$0xff]
    %v943 = vld [vmem:[#allocation2 + $0x70] sm:$0xff]
    %v944 = vld [vmem:[#allocation2 + $0x78] sm:$0xff]
    %945 = vmatprep.subr.mxu0 %v378
    %946 = vmatpush1.msra.mxu0 %v377
    %947 = vmatprep.subr.mxu0 %v382
    %948 = vmatpush1.msra.mxu0 %v381
    %949 = vmatprep.subr.mxu0 %v386
    %950 = vmatpush1.msra.mxu0 %v385
    %951 = vmatprep.subr.mxu0 %v390
    %952 = vmatpush1.msra.mxu0 %v389
    %953 = vmatprep.subr.mxu0 %v394
    %954 = vmatpush1.msra.mxu0 %v393
    %955 = vmatprep.subr.mxu0 %v398
    %956 = vmatpush1.msra.mxu0 %v397
    %957 = vmatprep.subr.mxu0 %v402
    %958 = vmatpush1.msra.mxu0 %v401
    %959 = vmatprep.subr.mxu0 %v406
    %960 = vmatpush1.msra.mxu0 %v405
    %961 = vmatprep.subr.mxu0 %v410
    %962 = vmatpush1.msra.mxu0 %v409
    %963 = vmatprep.subr.mxu0 %v414
    %964 = vmatpush1.msra.mxu0 %v413
    %965 = vmatprep.subr.mxu0 %v418
    %966 = vmatpush1.msra.mxu0 %v417
    %967 = vmatprep.subr.mxu0 %v422
    %968 = vmatpush1.msra.mxu0 %v421
    %969 = vmatprep.subr.mxu0 %v426
    %970 = vmatpush1.msra.mxu0 %v425
    %971 = vmatprep.subr.mxu0 %v430
    %972 = vmatpush1.msra.mxu0 %v429
    %973 = vmatprep.subr.mxu0 %v434
    %974 = vmatpush1.msra.mxu0 %v433
    %975 = vmatprep.subr.mxu0 %v438
    %976 = vmatpush1.msra.mxu0 %v437
    %977 = vmatprep.subr.mxu0 0.0
    %978 = vmatpush1.msra.mxu0 0.0
    %979 = vmatprep.subr.mxu0 0.0
    %980 = vmatpush1.msra.mxu0 0.0
    %981 = vmatprep.subr.mxu0 0.0
    %982 = vmatpush1.msra.mxu0 0.0
    %983 = vmatprep.subr.mxu0 0.0
    %984 = vmatpush1.msra.mxu0 0.0
    %985 = vmatprep.subr.mxu0 0.0
    %986 = vmatpush1.msra.mxu0 0.0
    %987 = vmatprep.subr.mxu0 0.0
    %988 = vmatpush1.msra.mxu0 0.0
    %989 = vmatprep.subr.mxu0 0.0
    %990 = vmatpush1.msra.mxu0 0.0
    %991 = vmatprep.subr.mxu0 0.0
    %992 = vmatpush1.msra.mxu0 0.0
    %993 = vmatprep.subr.mxu0 0.0
    %994 = vmatpush1.msra.mxu0 0.0
    %995 = vmatprep.subr.mxu0 0.0
    %996 = vmatpush1.msra.mxu0 0.0
    %997 = vmatprep.subr.mxu0 0.0
    %998 = vmatpush1.msra.mxu0 0.0
    %999 = vmatprep.subr.mxu0 0.0
    %1000 = vmatpush1.msra.mxu0 0.0
    %1001 = vmatprep.subr.mxu0 0.0
    %1002 = vmatpush1.msra.mxu0 0.0
    %1003 = vmatprep.subr.mxu0 0.0
    %1004 = vmatpush1.msra.mxu0 0.0
    %1005 = vmatprep.subr.mxu0 0.0
    %1006 = vmatpush1.msra.mxu0 0.0
    %1007 = vmatprep.subr.mxu0 0.0
    %1008 = vmatpush1.msra.mxu0 0.0
    %1009 = vmatprep.mubr.f32.mxu0 0.0
    %1010 = vmatmul.mubr.f32.gmra.mrb[0].mxu0 %v940
    %v1011 = vpop.f32.mrb[0].mxu0
    %v1012 = vadd.f32 0.0, %v1011
    %v1013 = vpop.f32.mrb[0].mxu0
    %v1014 = vadd.f32 0.0, %v1013
    %1015 = vdwg.mxu0
    %1016 = vmatprep.subr.mxu0 %v380
    %1017 = vmatpush1.msra.mxu0 %v379
    %1018 = vmatprep.subr.mxu0 %v384
    %1019 = vmatpush1.msra.mxu0 %v383
    %1020 = vmatprep.subr.mxu0 %v388
    %1021 = vmatpush1.msra.mxu0 %v387
    %1022 = vmatprep.subr.mxu0 %v392
    %1023 = vmatpush1.msra.mxu0 %v391
    %1024 = vmatprep.subr.mxu0 %v396
    %1025 = vmatpush1.msra.mxu0 %v395
    %1026 = vmatprep.subr.mxu0 %v400
    %1027 = vmatpush1.msra.mxu0 %v399
    %1028 = vmatprep.subr.mxu0 %v404
    %1029 = vmatpush1.msra.mxu0 %v403
    %1030 = vmatprep.subr.mxu0 %v408
    %1031 = vmatpush1.msra.mxu0 %v407
    %1032 = vmatprep.subr.mxu0 %v412
    %1033 = vmatpush1.msra.mxu0 %v411
    %1034 = vmatprep.subr.mxu0 %v416
    %1035 = vmatpush1.msra.mxu0 %v415
    %1036 = vmatprep.subr.mxu0 %v420
    %1037 = vmatpush1.msra.mxu0 %v419
    %1038 = vmatprep.subr.mxu0 %v424
    %1039 = vmatpush1.msra.mxu0 %v423
    %1040 = vmatprep.subr.mxu0 %v428
    %1041 = vmatpush1.msra.mxu0 %v427
    %1042 = vmatprep.subr.mxu0 %v432
    %1043 = vmatpush1.msra.mxu0 %v431
    %1044 = vmatprep.subr.mxu0 %v436
    %1045 = vmatpush1.msra.mxu0 %v435
    %1046 = vmatprep.subr.mxu0 %v440
    %1047 = vmatpush1.msra.mxu0 %v439
    %1048 = vmatprep.subr.mxu0 0.0
    %1049 = vmatpush1.msra.mxu0 0.0
    %1050 = vmatprep.subr.mxu0 0.0
    %1051 = vmatpush1.msra.mxu0 0.0
    %1052 = vmatprep.subr.mxu0 0.0
    %1053 = vmatpush1.msra.mxu0 0.0
    %1054 = vmatprep.subr.mxu0 0.0
    %1055 = vmatpush1.msra.mxu0 0.0
    %1056 = vmatprep.subr.mxu0 0.0
    %1057 = vmatpush1.msra.mxu0 0.0
    %1058 = vmatprep.subr.mxu0 0.0
    %1059 = vmatpush1.msra.mxu0 0.0
    %1060 = vmatprep.subr.mxu0 0.0
    %1061 = vmatpush1.msra.mxu0 0.0
    %1062 = vmatprep.subr.mxu0 0.0
    %1063 = vmatpush1.msra.mxu0 0.0
    %1064 = vmatprep.subr.mxu0 0.0
    %1065 = vmatpush1.msra.mxu0 0.0
    %1066 = vmatprep.subr.mxu0 0.0
    %1067 = vmatpush1.msra.mxu0 0.0
    %1068 = vmatprep.subr.mxu0 0.0
    %1069 = vmatpush1.msra.mxu0 0.0
    %1070 = vmatprep.subr.mxu0 0.0
    %1071 = vmatpush1.msra.mxu0 0.0
    %1072 = vmatprep.subr.mxu0 0.0
    %1073 = vmatpush1.msra.mxu0 0.0
    %1074 = vmatprep.subr.mxu0 0.0
    %1075 = vmatpush1.msra.mxu0 0.0
    %1076 = vmatprep.subr.mxu0 0.0
    %1077 = vmatpush1.msra.mxu0 0.0
    %1078 = vmatprep.subr.mxu0 0.0
    %1079 = vmatpush1.msra.mxu0 0.0
    %1080 = vmatprep.mubr.f32.mxu0 0.0
    %1081 = vmatmul.mubr.f32.gmra.mrb[0].mxu0 %v940
    %v1082 = vpop.f32.mrb[0].mxu0
    %v1083 = vadd.f32 0.0, %v1082
    %v1084 = vpop.f32.mrb[0].mxu0
    %v1085 = vadd.f32 0.0, %v1084
    %1086 = vdwg.mxu0
    %v1087 = vadd.f32 %v941, %v1012
    %v1088 = vadd.f32 %v942, %v1014
    %v1089 = vadd.f32 %v943, %v1083
    %v1090 = vadd.f32 %v944, %v1085
    %v1091 = vmul.f32 %v1087, 0.5
    %v1092 = vmul.f32 %v1088, 0.5
    %v1093 = vmul.f32 %v1089, 0.5
    %v1094 = vtanh.pop %v1091
    %v1095 = vtanh.pop %v1092
    %v1096 = vtanh.pop %v1093
    %v1097 = vmul.f32 %v1094, 0.5
    %v1098 = vmul.f32 %v1095, 0.5
    %v1099 = vmul.f32 %v1096, 0.5
    %v1100 = vadd.f32 %v1097, 0.5
    %v1101 = vadd.f32 %v1098, 0.5
    %v1102 = vadd.f32 %v1099, 0.5
    %v1103 = vtanh.pop %v1090
    %v1104 = vmul.f32 %v1101, %v938
    %v1105 = vmul.f32 %v1100, %v1103
    %v1106 = vadd.f32 %v1104, %v1105
    %v1107 = vtanh.pop %v1106
    %v1108 = vmul.f32 %v1102, %v1107
    %v1109 = vld [vmem:[#allocation2 + $0x80] sm:$0xff]
    %v1110 = vld [vmem:[#allocation2 + $0x88] sm:$0xff]
    %v1111 = vld [vmem:[#allocation2 + $0x90] sm:$0xff]
    %v1112 = vld [vmem:[#allocation2 + $0x98] sm:$0xff]
    %1113 = vmatprep.subr.mxu0 %v378
    %1114 = vmatpush1.msra.mxu0 %v377
    %1115 = vmatprep.subr.mxu0 %v382
    %1116 = vmatpush1.msra.mxu0 %v381
    %1117 = vmatprep.subr.mxu0 %v386
    %1118 = vmatpush1.msra.mxu0 %v385
    %1119 = vmatprep.subr.mxu0 %v390
    %1120 = vmatpush1.msra.mxu0 %v389
    %1121 = vmatprep.subr.mxu0 %v394
    %1122 = vmatpush1.msra.mxu0 %v393
    %1123 = vmatprep.subr.mxu0 %v398
    %1124 = vmatpush1.msra.mxu0 %v397
    %1125 = vmatprep.subr.mxu0 %v402
    %1126 = vmatpush1.msra.mxu0 %v401
    %1127 = vmatprep.subr.mxu0 %v406
    %1128 = vmatpush1.msra.mxu0 %v405
    %1129 = vmatprep.subr.mxu0 %v410
    %1130 = vmatpush1.msra.mxu0 %v409
    %1131 = vmatprep.subr.mxu0 %v414
    %1132 = vmatpush1.msra.mxu0 %v413
    %1133 = vmatprep.subr.mxu0 %v418
    %1134 = vmatpush1.msra.mxu0 %v417
    %1135 = vmatprep.subr.mxu0 %v422
    %1136 = vmatpush1.msra.mxu0 %v421
    %1137 = vmatprep.subr.mxu0 %v426
    %1138 = vmatpush1.msra.mxu0 %v425
    %1139 = vmatprep.subr.mxu0 %v430
    %1140 = vmatpush1.msra.mxu0 %v429
    %1141 = vmatprep.subr.mxu0 %v434
    %1142 = vmatpush1.msra.mxu0 %v433
    %1143 = vmatprep.subr.mxu0 %v438
    %1144 = vmatpush1.msra.mxu0 %v437
    %1145 = vmatprep.subr.mxu0 0.0
    %1146 = vmatpush1.msra.mxu0 0.0
    %1147 = vmatprep.subr.mxu0 0.0
    %1148 = vmatpush1.msra.mxu0 0.0
    %1149 = vmatprep.subr.mxu0 0.0
    %1150 = vmatpush1.msra.mxu0 0.0
    %1151 = vmatprep.subr.mxu0 0.0
    %1152 = vmatpush1.msra.mxu0 0.0
    %1153 = vmatprep.subr.mxu0 0.0
    %1154 = vmatpush1.msra.mxu0 0.0
    %1155 = vmatprep.subr.mxu0 0.0
    %1156 = vmatpush1.msra.mxu0 0.0
    %1157 = vmatprep.subr.mxu0 0.0
    %1158 = vmatpush1.msra.mxu0 0.0
    %1159 = vmatprep.subr.mxu0 0.0
    %1160 = vmatpush1.msra.mxu0 0.0
    %1161 = vmatprep.subr.mxu0 0.0
    %1162 = vmatpush1.msra.mxu0 0.0
    %1163 = vmatprep.subr.mxu0 0.0
    %1164 = vmatpush1.msra.mxu0 0.0
    %1165 = vmatprep.subr.mxu0 0.0
    %1166 = vmatpush1.msra.mxu0 0.0
    %1167 = vmatprep.subr.mxu0 0.0
    %1168 = vmatpush1.msra.mxu0 0.0
    %1169 = vmatprep.subr.mxu0 0.0
    %1170 = vmatpush1.msra.mxu0 0.0
    %1171 = vmatprep.subr.mxu0 0.0
    %1172 = vmatpush1.msra.mxu0 0.0
    %1173 = vmatprep.subr.mxu0 0.0
    %1174 = vmatpush1.msra.mxu0 0.0
    %1175 = vmatprep.subr.mxu0 0.0
    %1176 = vmatpush1.msra.mxu0 0.0
    %1177 = vmatprep.mubr.f32.mxu0 0.0
    %1178 = vmatmul.mubr.f32.gmra.mrb[0].mxu0 %v1108
    %v1179 = vpop.f32.mrb[0].mxu0
    %v1180 = vadd.f32 0.0, %v1179
    %v1181 = vpop.f32.mrb[0].mxu0
    %v1182 = vadd.f32 0.0, %v1181
    %1183 = vdwg.mxu0
    %1184 = vmatprep.subr.mxu0 %v380
    %1185 = vmatpush1.msra.mxu0 %v379
    %1186 = vmatprep.subr.mxu0 %v384
    %1187 = vmatpush1.msra.mxu0 %v383
    %1188 = vmatprep.subr.mxu0 %v388
    %1189 = vmatpush1.msra.mxu0 %v387
    %1190 = vmatprep.subr.mxu0 %v392
    %1191 = vmatpush1.msra.mxu0 %v391
    %1192 = vmatprep.subr.mxu0 %v396
    %1193 = vmatpush1.msra.mxu0 %v395
    %1194 = vmatprep.subr.mxu0 %v400
    %1195 = vmatpush1.msra.mxu0 %v399
    %1196 = vmatprep.subr.mxu0 %v404
    %1197 = vmatpush1.msra.mxu0 %v403
    %1198 = vmatprep.subr.mxu0 %v408
    %1199 = vmatpush1.msra.mxu0 %v407
    %1200 = vmatprep.subr.mxu0 %v412
    %1201 = vmatpush1.msra.mxu0 %v411
    %1202 = vmatprep.subr.mxu0 %v416
    %1203 = vmatpush1.msra.mxu0 %v415
    %1204 = vmatprep.subr.mxu0 %v420
    %1205 = vmatpush1.msra.mxu0 %v419
    %1206 = vmatprep.subr.mxu0 %v424
    %1207 = vmatpush1.msra.mxu0 %v423
    %1208 = vmatprep.subr.mxu0 %v428
    %1209 = vmatpush1.msra.mxu0 %v427
    %1210 = vmatprep.subr.mxu0 %v432
    %1211 = vmatpush1.msra.mxu0 %v431
    %1212 = vmatprep.subr.mxu0 %v436
    %1213 = vmatpush1.msra.mxu0 %v435
    %1214 = vmatprep.subr.mxu0 %v440
    %1215 = vmatpush1.msra.mxu0 %v439
    %1216 = vmatprep.subr.mxu0 0.0
    %1217 = vmatpush1.msra.mxu0 0.0
    %1218 = vmatprep.subr.mxu0 0.0
    %1219 = vmatpush1.msra.mxu0 0.0
    %1220 = vmatprep.subr.mxu0 0.0
    %1221 = vmatpush1.msra.mxu0 0.0
    %1222 = vmatprep.subr.mxu0 0.0
    %1223 = vmatpush1.msra.mxu0 0.0
    %1224 = vmatprep.subr.mxu0 0.0
    %1225 = vmatpush1.msra.mxu0 0.0
    %1226 = vmatprep.subr.mxu0 0.0
    %1227 = vmatpush1.msra.mxu0 0.0
    %1228 = vmatprep.subr.mxu0 0.0
    %1229 = vmatpush1.msra.mxu0 0.0
    %1230 = vmatprep.subr.mxu0 0.0
    %1231 = vmatpush1.msra.mxu0 0.0
    %1232 = vmatprep.subr.mxu0 0.0
    %1233 = vmatpush1.msra.mxu0 0.0
    %1234 = vmatprep.subr.mxu0 0.0
    %1235 = vmatpush1.msra.mxu0 0.0
    %1236 = vmatprep.subr.mxu0 0.0
    %1237 = vmatpush1.msra.mxu0 0.0
    %1238 = vmatprep.subr.mxu0 0.0
    %1239 = vmatpush1.msra.mxu0 0.0
    %1240 = vmatprep.subr.mxu0 0.0
    %1241 = vmatpush1.msra.mxu0 0.0
    %1242 = vmatprep.subr.mxu0 0.0
    %1243 = vmatpush1.msra.mxu0 0.0
    %1244 = vmatprep.subr.mxu0 0.0
    %1245 = vmatpush1.msra.mxu0 0.0
    %1246 = vmatprep.subr.mxu0 0.0
    %1247 = vmatpush1.msra.mxu0 0.0
    %1248 = vmatprep.mubr.f32.mxu0 0.0
    %1249 = vmatmul.mubr.f32.gmra.mrb[0].mxu0 %v1108
    %v1250 = vpop.f32.mrb[0].mxu0
    %v1251 = vadd.f32 0.0, %v1250
    %v1252 = vpop.f32.mrb[0].mxu0
    %v1253 = vadd.f32 0.0, %v1252
    %1254 = vdwg.mxu0
    %v1255 = vadd.f32 %v1109, %v1180
    %v1256 = vadd.f32 %v1110, %v1182
    %v1257 = vadd.f32 %v1111, %v1251
    %v1258 = vadd.f32 %v1112, %v1253
    %v1259 = vmul.f32 %v1255, 0.5
    %v1260 = vmul.f32 %v1256, 0.5
    %v1261 = vmul.f32 %v1257, 0.5
    %v1262 = vtanh.pop %v1259
    %v1263 = vtanh.pop %v1260
    %v1264 = vtanh.pop %v1261
    %v1265 = vmul.f32 %v1262, 0.5
    %v1266 = vmul.f32 %v1263, 0.5
    %v1267 = vmul.f32 %v1264, 0.5
    %v1268 = vadd.f32 %v1265, 0.5
    %v1269 = vadd.f32 %v1266, 0.5
    %v1270 = vadd.f32 %v1267, 0.5
    %v1271 = vtanh.pop %v1258
    %v1272 = vmul.f32 %v1269, %v1106
    %v1273 = vmul.f32 %v1268, %v1271
    %v1274 = vadd.f32 %v1272, %v1273
    %v1275 = vtanh.pop %v1274
    %v1276 = vmul.f32 %v1270, %v1275
    %v1277 = vld [vmem:[#allocation2 + $0xa0] sm:$0xff]
    %v1278 = vld [vmem:[#allocation2 + $0xa8] sm:$0xff]
    %v1279 = vld [vmem:[#allocation2 + $0xb0] sm:$0xff]
    %v1280 = vld [vmem:[#allocation2 + $0xb8] sm:$0xff]
    %1281 = vmatprep.subr.mxu0 %v378
    %1282 = vmatpush1.msra.mxu0 %v377
    %1283 = vmatprep.subr.mxu0 %v382
    %1284 = vmatpush1.msra.mxu0 %v381
    %1285 = vmatprep.subr.mxu0 %v386
    %1286 = vmatpush1.msra.mxu0 %v385
    %1287 = vmatprep.subr.mxu0 %v390
    %1288 = vmatpush1.msra.mxu0 %v389
    %1289 = vmatprep.subr.mxu0 %v394
    %1290 = vmatpush1.msra.mxu0 %v393
    %1291 = vmatprep.subr.mxu0 %v398
    %1292 = vmatpush1.msra.mxu0 %v397
    %1293 = vmatprep.subr.mxu0 %v402
    %1294 = vmatpush1.msra.mxu0 %v401
    %1295 = vmatprep.subr.mxu0 %v406
    %1296 = vmatpush1.msra.mxu0 %v405
    %1297 = vmatprep.subr.mxu0 %v410
    %1298 = vmatpush1.msra.mxu0 %v409
    %1299 = vmatprep.subr.mxu0 %v414
    %1300 = vmatpush1.msra.mxu0 %v413
    %1301 = vmatprep.subr.mxu0 %v418
    %1302 = vmatpush1.msra.mxu0 %v417
    %1303 = vmatprep.subr.mxu0 %v422
    %1304 = vmatpush1.msra.mxu0 %v421
    %1305 = vmatprep.subr.mxu0 %v426
    %1306 = vmatpush1.msra.mxu0 %v425
    %1307 = vmatprep.subr.mxu0 %v430
    %1308 = vmatpush1.msra.mxu0 %v429
    %1309 = vmatprep.subr.mxu0 %v434
    %1310 = vmatpush1.msra.mxu0 %v433
    %1311 = vmatprep.subr.mxu0 %v438
    %1312 = vmatpush1.msra.mxu0 %v437
    %1313 = vmatprep.subr.mxu0 0.0
    %1314 = vmatpush1.msra.mxu0 0.0
    %1315 = vmatprep.subr.mxu0 0.0
    %1316 = vmatpush1.msra.mxu0 0.0
    %1317 = vmatprep.subr.mxu0 0.0
    %1318 = vmatpush1.msra.mxu0 0.0
    %1319 = vmatprep.subr.mxu0 0.0
    %1320 = vmatpush1.msra.mxu0 0.0
    %1321 = vmatprep.subr.mxu0 0.0
    %1322 = vmatpush1.msra.mxu0 0.0
    %1323 = vmatprep.subr.mxu0 0.0
    %1324 = vmatpush1.msra.mxu0 0.0
    %1325 = vmatprep.subr.mxu0 0.0
    %1326 = vmatpush1.msra.mxu0 0.0
    %1327 = vmatprep.subr.mxu0 0.0
    %1328 = vmatpush1.msra.mxu0 0.0
    %1329 = vmatprep.subr.mxu0 0.0
    %1330 = vmatpush1.msra.mxu0 0.0
    %1331 = vmatprep.subr.mxu0 0.0
    %1332 = vmatpush1.msra.mxu0 0.0
    %1333 = vmatprep.subr.mxu0 0.0
    %1334 = vmatpush1.msra.mxu0 0.0
    %1335 = vmatprep.subr.mxu0 0.0
    %1336 = vmatpush1.msra.mxu0 0.0
    %1337 = vmatprep.subr.mxu0 0.0
    %1338 = vmatpush1.msra.mxu0 0.0
    %1339 = vmatprep.subr.mxu0 0.0
    %1340 = vmatpush1.msra.mxu0 0.0
    %1341 = vmatprep.subr.mxu0 0.0
    %1342 = vmatpush1.msra.mxu0 0.0
    %1343 = vmatprep.subr.mxu0 0.0
    %1344 = vmatpush1.msra.mxu0 0.0
    %1345 = vmatprep.mubr.f32.mxu0 0.0
    %1346 = vmatmul.mubr.f32.gmra.mrb[0].mxu0 %v1276
    %v1347 = vpop.f32.mrb[0].mxu0
    %v1348 = vadd.f32 0.0, %v1347
    %v1349 = vpop.f32.mrb[0].mxu0
    %v1350 = vadd.f32 0.0, %v1349
    %1351 = vdwg.mxu0
    %1352 = vmatprep.subr.mxu0 %v380
    %1353 = vmatpush1.msra.mxu0 %v379
    %1354 = vmatprep.subr.mxu0 %v384
    %1355 = vmatpush1.msra.mxu0 %v383
    %1356 = vmatprep.subr.mxu0 %v388
    %1357 = vmatpush1.msra.mxu0 %v387
    %1358 = vmatprep.subr.mxu0 %v392
    %1359 = vmatpush1.msra.mxu0 %v391
    %1360 = vmatprep.subr.mxu0 %v396
    %1361 = vmatpush1.msra.mxu0 %v395
    %1362 = vmatprep.subr.mxu0 %v400
    %1363 = vmatpush1.msra.mxu0 %v399
    %1364 = vmatprep.subr.mxu0 %v404
    %1365 = vmatpush1.msra.mxu0 %v403
    %1366 = vmatprep.subr.mxu0 %v408
    %1367 = vmatpush1.msra.mxu0 %v407
    %1368 = vmatprep.subr.mxu0 %v412
    %1369 = vmatpush1.msra.mxu0 %v411
    %1370 = vmatprep.subr.mxu0 %v416
    %1371 = vmatpush1.msra.mxu0 %v415
    %1372 = vmatprep.subr.mxu0 %v420
    %1373 = vmatpush1.msra.mxu0 %v419
    %1374 = vmatprep.subr.mxu0 %v424
    %1375 = vmatpush1.msra.mxu0 %v423
    %1376 = vmatprep.subr.mxu0 %v428
    %1377 = vmatpush1.msra.mxu0 %v427
    %1378 = vmatprep.subr.mxu0 %v432
    %1379 = vmatpush1.msra.mxu0 %v431
    %1380 = vmatprep.subr.mxu0 %v436
    %1381 = vmatpush1.msra.mxu0 %v435
    %1382 = vmatprep.subr.mxu0 %v440
    %1383 = vmatpush1.msra.mxu0 %v439
    %1384 = vmatprep.subr.mxu0 0.0
    %1385 = vmatpush1.msra.mxu0 0.0
    %1386 = vmatprep.subr.mxu0 0.0
    %1387 = vmatpush1.msra.mxu0 0.0
    %1388 = vmatprep.subr.mxu0 0.0
    %1389 = vmatpush1.msra.mxu0 0.0
    %1390 = vmatprep.subr.mxu0 0.0
    %1391 = vmatpush1.msra.mxu0 0.0
    %1392 = vmatprep.subr.mxu0 0.0
    %1393 = vmatpush1.msra.mxu0 0.0
    %1394 = vmatprep.subr.mxu0 0.0
    %1395 = vmatpush1.msra.mxu0 0.0
    %1396 = vmatprep.subr.mxu0 0.0
    %1397 = vmatpush1.msra.mxu0 0.0
    %1398 = vmatprep.subr.mxu0 0.0
    %1399 = vmatpush1.msra.mxu0 0.0
    %1400 = vmatprep.subr.mxu0 0.0
    %1401 = vmatpush1.msra.mxu0 0.0
    %1402 = vmatprep.subr.mxu0 0.0
    %1403 = vmatpush1.msra.mxu0 0.0
    %1404 = vmatprep.subr.mxu0 0.0
    %1405 = vmatpush1.msra.mxu0 0.0
    %1406 = vmatprep.subr.mxu0 0.0
    %1407 = vmatpush1.msra.mxu0 0.0
    %1408 = vmatprep.subr.mxu0 0.0
    %1409 = vmatpush1.msra.mxu0 0.0
    %1410 = vmatprep.subr.mxu0 0.0
    %1411 = vmatpush1.msra.mxu0 0.0
    %1412 = vmatprep.subr.mxu0 0.0
    %1413 = vmatpush1.msra.mxu0 0.0
    %1414 = vmatprep.subr.mxu0 0.0
    %1415 = vmatpush1.msra.mxu0 0.0
    %1416 = vmatprep.mubr.f32.mxu0 0.0
    %1417 = vmatmul.mubr.f32.gmra.mrb[0].mxu0 %v1276
    %v1418 = vpop.f32.mrb[0].mxu0
    %v1419 = vadd.f32 0.0, %v1418
    %v1420 = vpop.f32.mrb[0].mxu0
    %v1421 = vadd.f32 0.0, %v1420
    %1422 = vdwg.mxu0
    %v1423 = vadd.f32 %v1277, %v1348
    %v1424 = vadd.f32 %v1278, %v1350
    %v1425 = vadd.f32 %v1279, %v1419
    %v1426 = vadd.f32 %v1280, %v1421
    %v1427 = vmul.f32 %v1423, 0.5
    %v1428 = vmul.f32 %v1424, 0.5
    %v1429 = vmul.f32 %v1425, 0.5
    %v1430 = vtanh.pop %v1427
    %v1431 = vtanh.pop %v1428
    %v1432 = vtanh.pop %v1429
    %v1433 = vmul.f32 %v1430, 0.5
    %v1434 = vmul.f32 %v1431, 0.5
    %v1435 = vmul.f32 %v1432, 0.5
    %v1436 = vadd.f32 %v1433, 0.5
    %v1437 = vadd.f32 %v1434, 0.5
    %v1438 = vadd.f32 %v1435, 0.5
    %v1439 = vtanh.pop %v1426
    %v1440 = vmul.f32 %v1437, %v1274
    %v1441 = vmul.f32 %v1436, %v1439
    %v1442 = vadd.f32 %v1440, %v1441
    %v1443 = vtanh.pop %v1442
    %v1444 = vmul.f32 %v1438, %v1443
    %v1445 = vld [vmem:[#allocation2 + $0xc0] sm:$0xff]
    %v1446 = vld [vmem:[#allocation2 + $0xc8] sm:$0xff]
    %v1447 = vld [vmem:[#allocation2 + $0xd0] sm:$0xff]
    %v1448 = vld [vmem:[#allocation2 + $0xd8] sm:$0xff]
    %1449 = vmatprep.subr.mxu0 %v378
    %1450 = vmatpush1.msra.mxu0 %v377
    %1451 = vmatprep.subr.mxu0 %v382
    %1452 = vmatpush1.msra.mxu0 %v381
    %1453 = vmatprep.subr.mxu0 %v386
    %1454 = vmatpush1.msra.mxu0 %v385
    %1455 = vmatprep.subr.mxu0 %v390
    %1456 = vmatpush1.msra.mxu0 %v389
    %1457 = vmatprep.subr.mxu0 %v394
    %1458 = vmatpush1.msra.mxu0 %v393
    %1459 = vmatprep.subr.mxu0 %v398
    %1460 = vmatpush1.msra.mxu0 %v397
    %1461 = vmatprep.subr.mxu0 %v402
    %1462 = vmatpush1.msra.mxu0 %v401
    %1463 = vmatprep.subr.mxu0 %v406
    %1464 = vmatpush1.msra.mxu0 %v405
    %1465 = vmatprep.subr.mxu0 %v410
    %1466 = vmatpush1.msra.mxu0 %v409
    %1467 = vmatprep.subr.mxu0 %v414
    %1468 = vmatpush1.msra.mxu0 %v413
    %1469 = vmatprep.subr.mxu0 %v418
    %1470 = vmatpush1.msra.mxu0 %v417
    %1471 = vmatprep.subr.mxu0 %v422
    %1472 = vmatpush1.msra.mxu0 %v421
    %1473 = vmatprep.subr.mxu0 %v426
    %1474 = vmatpush1.msra.mxu0 %v425
    %1475 = vmatprep.subr.mxu0 %v430
    %1476 = vmatpush1.msra.mxu0 %v429
    %1477 = vmatprep.subr.mxu0 %v434
    %1478 = vmatpush1.msra.mxu0 %v433
    %1479 = vmatprep.subr.mxu0 %v438
    %1480 = vmatpush1.msra.mxu0 %v437
    %1481 = vmatprep.subr.mxu0 0.0
    %1482 = vmatpush1.msra.mxu0 0.0
    %1483 = vmatprep.subr.mxu0 0.0
    %1484 = vmatpush1.msra.mxu0 0.0
    %1485 = vmatprep.subr.mxu0 0.0
    %1486 = vmatpush1.msra.mxu0 0.0
    %1487 = vmatprep.subr.mxu0 0.0
    %1488 = vmatpush1.msra.mxu0 0.0
    %1489 = vmatprep.subr.mxu0 0.0
    %1490 = vmatpush1.msra.mxu0 0.0
    %1491 = vmatprep.subr.mxu0 0.0
    %1492 = vmatpush1.msra.mxu0 0.0
    %1493 = vmatprep.subr.mxu0 0.0
    %1494 = vmatpush1.msra.mxu0 0.0
    %1495 = vmatprep.subr.mxu0 0.0
    %1496 = vmatpush1.msra.mxu0 0.0
    %1497 = vmatprep.subr.mxu0 0.0
    %1498 = vmatpush1.msra.mxu0 0.0
    %1499 = vmatprep.subr.mxu0 0.0
    %1500 = vmatpush1.msra.mxu0 0.0
    %1501 = vmatprep.subr.mxu0 0.0
    %1502 = vmatpush1.msra.mxu0 0.0
    %1503 = vmatprep.subr.mxu0 0.0
    %1504 = vmatpush1.msra.mxu0 0.0
    %1505 = vmatprep.subr.mxu0 0.0
    %1506 = vmatpush1.msra.mxu0 0.0
    %1507 = vmatprep.subr.mxu0 0.0
    %1508 = vmatpush1.msra.mxu0 0.0
    %1509 = vmatprep.subr.mxu0 0.0
    %1510 = vmatpush1.msra.mxu0 0.0
    %1511 = vmatprep.subr.mxu0 0.0
    %1512 = vmatpush1.msra.mxu0 0.0
    %1513 = vmatprep.mubr.f32.mxu0 0.0
    %1514 = vmatmul.mubr.f32.gmra.mrb[0].mxu0 %v1444
    %v1515 = vpop.f32.mrb[0].mxu0
    %v1516 = vadd.f32 0.0, %v1515
    %v1517 = vpop.f32.mrb[0].mxu0
    %v1518 = vadd.f32 0.0, %v1517
    %1519 = vdwg.mxu0
    %1520 = vmatprep.subr.mxu0 %v380
    %1521 = vmatpush1.msra.mxu0 %v379
    %1522 = vmatprep.subr.mxu0 %v384
    %1523 = vmatpush1.msra.mxu0 %v383
    %1524 = vmatprep.subr.mxu0 %v388
    %1525 = vmatpush1.msra.mxu0 %v387
    %1526 = vmatprep.subr.mxu0 %v392
    %1527 = vmatpush1.msra.mxu0 %v391
    %1528 = vmatprep.subr.mxu0 %v396
    %1529 = vmatpush1.msra.mxu0 %v395
    %1530 = vmatprep.subr.mxu0 %v400
    %1531 = vmatpush1.msra.mxu0 %v399
    %1532 = vmatprep.subr.mxu0 %v404
    %1533 = vmatpush1.msra.mxu0 %v403
    %1534 = vmatprep.subr.mxu0 %v408
    %1535 = vmatpush1.msra.mxu0 %v407
    %1536 = vmatprep.subr.mxu0 %v412
    %1537 = vmatpush1.msra.mxu0 %v411
    %1538 = vmatprep.subr.mxu0 %v416
    %1539 = vmatpush1.msra.mxu0 %v415
    %1540 = vmatprep.subr.mxu0 %v420
    %1541 = vmatpush1.msra.mxu0 %v419
    %1542 = vmatprep.subr.mxu0 %v424
    %1543 = vmatpush1.msra.mxu0 %v423
    %1544 = vmatprep.subr.mxu0 %v428
    %1545 = vmatpush1.msra.mxu0 %v427
    %1546 = vmatprep.subr.mxu0 %v432
    %1547 = vmatpush1.msra.mxu0 %v431
    %1548 = vmatprep.subr.mxu0 %v436
    %1549 = vmatpush1.msra.mxu0 %v435
    %1550 = vmatprep.subr.mxu0 %v440
    %1551 = vmatpush1.msra.mxu0 %v439
    %1552 = vmatprep.subr.mxu0 0.0
    %1553 = vmatpush1.msra.mxu0 0.0
    %1554 = vmatprep.subr.mxu0 0.0
    %1555 = vmatpush1.msra.mxu0 0.0
    %1556 = vmatprep.subr.mxu0 0.0
    %1557 = vmatpush1.msra.mxu0 0.0
    %1558 = vmatprep.subr.mxu0 0.0
    %1559 = vmatpush1.msra.mxu0 0.0
    %1560 = vmatprep.subr.mxu0 0.0
    %1561 = vmatpush1.msra.mxu0 0.0
    %1562 = vmatprep.subr.mxu0 0.0
    %1563 = vmatpush1.msra.mxu0 0.0
    %1564 = vmatprep.subr.mxu0 0.0
    %1565 = vmatpush1.msra.mxu0 0.0
    %1566 = vmatprep.subr.mxu0 0.0
    %1567 = vmatpush1.msra.mxu0 0.0
    %1568 = vmatprep.subr.mxu0 0.0
    %1569 = vmatpush1.msra.mxu0 0.0
    %1570 = vmatprep.subr.mxu0 0.0
    %1571 = vmatpush1.msra.mxu0 0.0
    %1572 = vmatprep.subr.mxu0 0.0
    %1573 = vmatpush1.msra.mxu0 0.0
    %1574 = vmatprep.subr.mxu0 0.0
    %1575 = vmatpush1.msra.mxu0 0.0
    %1576 = vmatprep.subr.mxu0 0.0
    %1577 = vmatpush1.msra.mxu0 0.0
    %1578 = vmatprep.subr.mxu0 0.0
    %1579 = vmatpush1.msra.mxu0 0.0
    %1580 = vmatprep.subr.mxu0 0.0
    %1581 = vmatpush1.msra.mxu0 0.0
    %1582 = vmatprep.subr.mxu0 0.0
    %1583 = vmatpush1.msra.mxu0 0.0
    %1584 = vmatprep.mubr.f32.mxu0 0.0
    %1585 = vmatmul.mubr.f32.gmra.mrb[0].mxu0 %v1444
    %v1586 = vpop.f32.mrb[0].mxu0
    %v1587 = vadd.f32 0.0, %v1586
    %v1588 = vpop.f32.mrb[0].mxu0
    %v1589 = vadd.f32 0.0, %v1588
    %1590 = vdwg.mxu0
    %v1591 = vadd.f32 %v1445, %v1516
    %v1592 = vadd.f32 %v1446, %v1518
    %v1593 = vadd.f32 %v1447, %v1587
    %v1594 = vadd.f32 %v1448, %v1589
    %v1595 = vmul.f32 %v1591, 0.5
    %v1596 = vmul.f32 %v1592, 0.5
    %v1597 = vmul.f32 %v1593, 0.5
    %v1598 = vtanh.pop %v1595
    %v1599 = vtanh.pop %v1596
    %v1600 = vtanh.pop %v1597
    %v1601 = vmul.f32 %v1598, 0.5
    %v1602 = vmul.f32 %v1599, 0.5
    %v1603 = vmul.f32 %v1600, 0.5
    %v1604 = vadd.f32 %v1601, 0.5
    %v1605 = vadd.f32 %v1602, 0.5
    %v1606 = vadd.f32 %v1603, 0.5
    %v1607 = vtanh.pop %v1594
    %v1608 = vmul.f32 %v1605, %v1442
    %v1609 = vmul.f32 %v1604, %v1607
    %v1610 = vadd.f32 %v1608, %v1609
    %v1611 = vtanh.pop %v1610
    %v1612 = vmul.f32 %v1606, %v1611
    %v1613 = vld [vmem:[#allocation2 + $0xe0] sm:$0xff]
    %v1614 = vld [vmem:[#allocation2 + $0xe8] sm:$0xff]
    %v1615 = vld [vmem:[#allocation2 + $0xf0] sm:$0xff]
    %v1616 = vld [vmem:[#allocation2 + $0xf8] sm:$0xff]
    %1617 = vmatprep.subr.mxu0 %v378
    %1618 = vmatpush1.msra.mxu0 %v377
    %1619 = vmatprep.subr.mxu0 %v382
    %1620 = vmatpush1.msra.mxu0 %v381
    %1621 = vmatprep.subr.mxu0 %v386
    %1622 = vmatpush1.msra.mxu0 %v385
    %1623 = vmatprep.subr.mxu0 %v390
    %1624 = vmatpush1.msra.mxu0 %v389
    %1625 = vmatprep.subr.mxu0 %v394
    %1626 = vmatpush1.msra.mxu0 %v393
    %1627 = vmatprep.subr.mxu0 %v398
    %1628 = vmatpush1.msra.mxu0 %v397
    %1629 = vmatprep.subr.mxu0 %v402
    %1630 = vmatpush1.msra.mxu0 %v401
    %1631 = vmatprep.subr.mxu0 %v406
    %1632 = vmatpush1.msra.mxu0 %v405
    %1633 = vmatprep.subr.mxu0 %v410
    %1634 = vmatpush1.msra.mxu0 %v409
    %1635 = vmatprep.subr.mxu0 %v414
    %1636 = vmatpush1.msra.mxu0 %v413
    %1637 = vmatprep.subr.mxu0 %v418
    %1638 = vmatpush1.msra.mxu0 %v417
    %1639 = vmatprep.subr.mxu0 %v422
    %1640 = vmatpush1.msra.mxu0 %v421
    %1641 = vmatprep.subr.mxu0 %v426
    %1642 = vmatpush1.msra.mxu0 %v425
    %1643 = vmatprep.subr.mxu0 %v430
    %1644 = vmatpush1.msra.mxu0 %v429
    %1645 = vmatprep.subr.mxu0 %v434
    %1646 = vmatpush1.msra.mxu0 %v433
    %1647 = vmatprep.subr.mxu0 %v438
    %1648 = vmatpush1.msra.mxu0 %v437
    %1649 = vmatprep.subr.mxu0 0.0
    %1650 = vmatpush1.msra.mxu0 0.0
    %1651 = vmatprep.subr.mxu0 0.0
    %1652 = vmatpush1.msra.mxu0 0.0
    %1653 = vmatprep.subr.mxu0 0.0
    %1654 = vmatpush1.msra.mxu0 0.0
    %1655 = vmatprep.subr.mxu0 0.0
    %1656 = vmatpush1.msra.mxu0 0.0
    %1657 = vmatprep.subr.mxu0 0.0
    %1658 = vmatpush1.msra.mxu0 0.0
    %1659 = vmatprep.subr.mxu0 0.0
    %1660 = vmatpush1.msra.mxu0 0.0
    %1661 = vmatprep.subr.mxu0 0.0
    %1662 = vmatpush1.msra.mxu0 0.0
    %1663 = vmatprep.subr.mxu0 0.0
    %1664 = vmatpush1.msra.mxu0 0.0
    %1665 = vmatprep.subr.mxu0 0.0
    %1666 = vmatpush1.msra.mxu0 0.0
    %1667 = vmatprep.subr.mxu0 0.0
    %1668 = vmatpush1.msra.mxu0 0.0
    %1669 = vmatprep.subr.mxu0 0.0
    %1670 = vmatpush1.msra.mxu0 0.0
    %1671 = vmatprep.subr.mxu0 0.0
    %1672 = vmatpush1.msra.mxu0 0.0
    %1673 = vmatprep.subr.mxu0 0.0
    %1674 = vmatpush1.msra.mxu0 0.0
    %1675 = vmatprep.subr.mxu0 0.0
    %1676 = vmatpush1.msra.mxu0 0.0
    %1677 = vmatprep.subr.mxu0 0.0
    %1678 = vmatpush1.msra.mxu0 0.0
    %1679 = vmatprep.subr.mxu0 0.0
    %1680 = vmatpush1.msra.mxu0 0.0
    %1681 = vmatprep.mubr.f32.mxu0 0.0
    %1682 = vmatmul.mubr.f32.gmra.mrb[0].mxu0 %v1612
    %v1683 = vpop.f32.mrb[0].mxu0
    %v1684 = vadd.f32 0.0, %v1683
    %v1685 = vpop.f32.mrb[0].mxu0
    %v1686 = vadd.f32 0.0, %v1685
    %1687 = vdwg.mxu0
    %1688 = vmatprep.subr.mxu0 %v380
    %1689 = vmatpush1.msra.mxu0 %v379
    %1690 = vmatprep.subr.mxu0 %v384
    %1691 = vmatpush1.msra.mxu0 %v383
    %1692 = vmatprep.subr.mxu0 %v388
    %1693 = vmatpush1.msra.mxu0 %v387
    %1694 = vmatprep.subr.mxu0 %v392
    %1695 = vmatpush1.msra.mxu0 %v391
    %1696 = vmatprep.subr.mxu0 %v396
    %1697 = vmatpush1.msra.mxu0 %v395
    %1698 = vmatprep.subr.mxu0 %v400
    %1699 = vmatpush1.msra.mxu0 %v399
    %1700 = vmatprep.subr.mxu0 %v404
    %1701 = vmatpush1.msra.mxu0 %v403
    %1702 = vmatprep.subr.mxu0 %v408
    %1703 = vmatpush1.msra.mxu0 %v407
    %1704 = vmatprep.subr.mxu0 %v412
    %1705 = vmatpush1.msra.mxu0 %v411
    %1706 = vmatprep.subr.mxu0 %v416
    %1707 = vmatpush1.msra.mxu0 %v415
    %1708 = vmatprep.subr.mxu0 %v420
    %1709 = vmatpush1.msra.mxu0 %v419
    %1710 = vmatprep.subr.mxu0 %v424
    %1711 = vmatpush1.msra.mxu0 %v423
    %1712 = vmatprep.subr.mxu0 %v428
    %1713 = vmatpush1.msra.mxu0 %v427
    %1714 = vmatprep.subr.mxu0 %v432
    %1715 = vmatpush1.msra.mxu0 %v431
    %1716 = vmatprep.subr.mxu0 %v436
    %1717 = vmatpush1.msra.mxu0 %v435
    %1718 = vmatprep.subr.mxu0 %v440
    %1719 = vmatpush1.msra.mxu0 %v439
    %1720 = vmatprep.subr.mxu0 0.0
    %1721 = vmatpush1.msra.mxu0 0.0
    %1722 = vmatprep.subr.mxu0 0.0
    %1723 = vmatpush1.msra.mxu0 0.0
    %1724 = vmatprep.subr.mxu0 0.0
    %1725 = vmatpush1.msra.mxu0 0.0
    %1726 = vmatprep.subr.mxu0 0.0
    %1727 = vmatpush1.msra.mxu0 0.0
    %1728 = vmatprep.subr.mxu0 0.0
    %1729 = vmatpush1.msra.mxu0 0.0
    %1730 = vmatprep.subr.mxu0 0.0
    %1731 = vmatpush1.msra.mxu0 0.0
    %1732 = vmatprep.subr.mxu0 0.0
    %1733 = vmatpush1.msra.mxu0 0.0
    %1734 = vmatprep.subr.mxu0 0.0
    %1735 = vmatpush1.msra.mxu0 0.0
    %1736 = vmatprep.subr.mxu0 0.0
    %1737 = vmatpush1.msra.mxu0 0.0
    %1738 = vmatprep.subr.mxu0 0.0
    %1739 = vmatpush1.msra.mxu0 0.0
    %1740 = vmatprep.subr.mxu0 0.0
    %1741 = vmatpush1.msra.mxu0 0.0
    %1742 = vmatprep.subr.mxu0 0.0
    %1743 = vmatpush1.msra.mxu0 0.0
    %1744 = vmatprep.subr.mxu0 0.0
    %1745 = vmatpush1.msra.mxu0 0.0
    %1746 = vmatprep.subr.mxu0 0.0
    %1747 = vmatpush1.msra.mxu0 0.0
    %1748 = vmatprep.subr.mxu0 0.0
    %1749 = vmatpush1.msra.mxu0 0.0
    %1750 = vmatprep.subr.mxu0 0.0
    %1751 = vmatpush1.msra.mxu0 0.0
    %1752 = vmatprep.mubr.f32.mxu0 0.0
    %1753 = vmatmul.mubr.f32.gmra.mrb[0].mxu0 %v1612
    %v1754 = vpop.f32.mrb[0].mxu0
    %v1755 = vadd.f32 0.0, %v1754
    %v1756 = vpop.f32.mrb[0].mxu0
    %v1757 = vadd.f32 0.0, %v1756
    %1758 = vdwg.mxu0
    %v1759 = vadd.f32 %v1613, %v1684
    %v1760 = vadd.f32 %v1614, %v1686
    %v1761 = vadd.f32 %v1615, %v1755
    %v1762 = vadd.f32 %v1616, %v1757
    %v1763 = vmul.f32 %v1759, 0.5
    %v1764 = vmul.f32 %v1760, 0.5
    %v1765 = vmul.f32 %v1761, 0.5
    %v1766 = vtanh.pop %v1763
    %v1767 = vtanh.pop %v1764
    %v1768 = vtanh.pop %v1765
    %v1769 = vmul.f32 %v1766, 0.5
    %v1770 = vmul.f32 %v1767, 0.5
    %v1771 = vmul.f32 %v1768, 0.5
    %v1772 = vadd.f32 %v1769, 0.5
    %v1773 = vadd.f32 %v1770, 0.5
    %v1774 = vadd.f32 %v1771, 0.5
    %v1775 = vtanh.pop %v1762
    %v1776 = vmul.f32 %v1773, %v1610
    %v1777 = vmul.f32 %v1772, %v1775
    %v1778 = vadd.f32 %v1776, %v1777
    %v1779 = vtanh.pop %v1778
    %v1780 = vmul.f32 %v1774, %v1779
    %v1781 = vld [vmem:[%s4] sm:$0xff]
    %v1782 = vld [vmem:[%s4 + $0x8] sm:$0xff]
    %v1783 = vld [vmem:[%s4 + $0x10] sm:$0xff]
    %v1784 = vld [vmem:[%s4 + $0x18] sm:$0xff]
    %v1785 = vld [vmem:[%s4 + $0x20] sm:$0xff]
    %v1786 = vld [vmem:[%s4 + $0x28] sm:$0xff]
    %v1787 = vld [vmem:[%s4 + $0x30] sm:$0xff]
    %v1788 = vld [vmem:[%s4 + $0x38] sm:$0xff]
    %v1789 = vld [vmem:[%s4 + $0x40] sm:$0xff]
    %v1790 = vld [vmem:[%s4 + $0x48] sm:$0xff]
    %v1791 = vld [vmem:[%s4 + $0x50] sm:$0xff]
    %v1792 = vld [vmem:[%s4 + $0x58] sm:$0xff]
    %v1793 = vld [vmem:[%s4 + $0x60] sm:$0xff]
    %v1794 = vld [vmem:[%s4 + $0x68] sm:$0xff]
    %v1795 = vld [vmem:[%s4 + $0x70] sm:$0xff]
    %v1796 = vld [vmem:[%s4 + $0x78] sm:$0xff]
    %v1797 = vld [vmem:[%s5] sm:$0x1]
    %v1799 = vlaneseq
    %v1800 = vshrl.u32 %v1799, 7
    %v1801 = vsub.s32 0, %v1800
    %v1802 = vrot.slane %v1797, %v1801
    %1804 = vmatprep.subr.mxu0 0.0
    %1805 = vmatpush1.msra.mxu0 %v1781
    %1806 = vmatprep.subr.mxu0 0.0
    %1807 = vmatpush1.msra.mxu0 %v1782
    %1808 = vmatprep.subr.mxu0 0.0
    %1809 = vmatpush1.msra.mxu0 %v1783
    %1810 = vmatprep.subr.mxu0 0.0
    %1811 = vmatpush1.msra.mxu0 %v1784
    %1812 = vmatprep.subr.mxu0 0.0
    %1813 = vmatpush1.msra.mxu0 %v1785
    %1814 = vmatprep.subr.mxu0 0.0
    %1815 = vmatpush1.msra.mxu0 %v1786
    %1816 = vmatprep.subr.mxu0 0.0
    %1817 = vmatpush1.msra.mxu0 %v1787
    %1818 = vmatprep.subr.mxu0 0.0
    %1819 = vmatpush1.msra.mxu0 %v1788
    %1820 = vmatprep.subr.mxu0 0.0
    %1821 = vmatpush1.msra.mxu0 %v1789
    %1822 = vmatprep.subr.mxu0 0.0
    %1823 = vmatpush1.msra.mxu0 %v1790
    %1824 = vmatprep.subr.mxu0 0.0
    %1825 = vmatpush1.msra.mxu0 %v1791
    %1826 = vmatprep.subr.mxu0 0.0
    %1827 = vmatpush1.msra.mxu0 %v1792
    %1828 = vmatprep.subr.mxu0 0.0
    %1829 = vmatpush1.msra.mxu0 %v1793
    %1830 = vmatprep.subr.mxu0 0.0
    %1831 = vmatpush1.msra.mxu0 %v1794
    %1832 = vmatprep.subr.mxu0 0.0
    %1833 = vmatpush1.msra.mxu0 %v1795
    %1834 = vmatprep.subr.mxu0 0.0
    %1835 = vmatpush1.msra.mxu0 %v1796
    %1836 = vmatprep.subr.mxu0 0.0
    %1837 = vmatpush1.msra.mxu0 0.0
    %1838 = vmatprep.subr.mxu0 0.0
    %1839 = vmatpush1.msra.mxu0 0.0
    %1840 = vmatprep.subr.mxu0 0.0
    %1841 = vmatpush1.msra.mxu0 0.0
    %1842 = vmatprep.subr.mxu0 0.0
    %1843 = vmatpush1.msra.mxu0 0.0
    %1844 = vmatprep.subr.mxu0 0.0
    %1845 = vmatpush1.msra.mxu0 0.0
    %1846 = vmatprep.subr.mxu0 0.0
    %1847 = vmatpush1.msra.mxu0 0.0
    %1848 = vmatprep.subr.mxu0 0.0
    %1849 = vmatpush1.msra.mxu0 0.0
    %1850 = vmatprep.subr.mxu0 0.0
    %1851 = vmatpush1.msra.mxu0 0.0
    %1852 = vmatprep.subr.mxu0 0.0
    %1853 = vmatpush1.msra.mxu0 0.0
    %1854 = vmatprep.subr.mxu0 0.0
    %1855 = vmatpush1.msra.mxu0 0.0
    %1856 = vmatprep.subr.mxu0 0.0
    %1857 = vmatpush1.msra.mxu0 0.0
    %1858 = vmatprep.subr.mxu0 0.0
    %1859 = vmatpush1.msra.mxu0 0.0
    %1860 = vmatprep.subr.mxu0 0.0
    %1861 = vmatpush1.msra.mxu0 0.0
    %1862 = vmatprep.subr.mxu0 0.0
    %1863 = vmatpush1.msra.mxu0 0.0
    %1864 = vmatprep.subr.mxu0 0.0
    %1865 = vmatpush1.msra.mxu0 0.0
    %1866 = vmatprep.subr.mxu0 0.0
    %1867 = vmatpush1.msra.mxu0 0.0
    %1868 = vmatprep.mubr.f32.mxu0 0.0
    %1869 = vmatmul.mubr.f32.gmra.mrb[0].mxu0 %v1780
    %v1870 = vpop.f32.mrb[0].mxu0
    %v1871 = vadd.f32 %v1802, %v1870
    %v1872 = vpop.f32.mrb[0].mxu0
    %1873 = vdwg.mxu0
    %vm1874 = vcmask 15360
    %1875 = vst.msk [vmem:[%s6] sm:$0xff] %vm1874, %v1871
    // Predicated region
    $region30: #{lstm_model_forward.1} parent=1 // pred_check
      _
    $region31: #{lstm_model_forward.1} parent=1 // pred_check_branch
      %1877 = sbr.rel (0) target = $region33
    $region32: #{lstm_model_forward.1} parent=1 // pred_region
      _
    $region33: #{lstm_model_forward.1} parent=1 // pred_fallthru
      _
    // Predicated region
    $region34: #{lstm_model_forward.1} parent=1 // pred_check
      _
    $region35: #{lstm_model_forward.1} parent=1 // pred_check_branch
      %1879 = sbr.rel (0) target = $region37
    $region36: #{lstm_model_forward.1} parent=1 // pred_region
      _
    $region37: #{lstm_model_forward.1} parent=1 // pred_fallthru
      _
    %1880 = vsyncpa [#allocation4], 1

</llo_original>
